<compile_context>
chip_gen: v6e
topology: v6e:2x2x1
jax: 0.10.0
libtpu: 0.0.40
codegen_flags: <defaults>
</compile_context>

<pallas_src>
import math
import functools

import jax
import jax.numpy as jnp
from jax.experimental import pallas as pl
from jax.experimental.pallas import tpu as pltpu


def _layernorm(v, gamma, beta, eps=1e-5):
    mu = jnp.mean(v, axis=-1, keepdims=True)
    var = jnp.mean((v - mu) ** 2, axis=-1, keepdims=True)
    return (v - mu) * jax.lax.rsqrt(var + eps) * gamma + beta


def _block_kernel(x_ref,
                  ln1_g_ref, ln1_b_ref,
                  w_in_ref, b_in_ref,
                  w_out_ref, b_out_ref,
                  ln2_g_ref, ln2_b_ref,
                  w_fc_ref, b_fc_ref,
                  w_proj_ref, b_proj_ref,
                  o_ref,
                  *, n_head: int, batch_block: int, matmul_dtype):
    H = n_head
    TB = batch_block
    mm_dt = matmul_dtype

    # Weights are pre-transposed (in-dim first) and, for W_q, pre-scaled by
    # 1/sqrt(Dh) in the wrapper, so every matmul is a plain MXU contraction.
    w_in = w_in_ref[...]      # (E, 3E)
    w_out = w_out_ref[...]    # (E, E)
    w_fc = w_fc_ref[...]      # (E, 4E)
    w_proj = w_proj_ref[...]  # (4E, E)

    def mm(a, w, bias2d):
        return jnp.dot(a.astype(mm_dt), w,
                       preferred_element_type=jnp.float32) + bias2d

    _, L, E = x_ref.shape
    Dh = E // H

    # Flatten the batch tile into the row dim: one big matmul per layer.
    x = x_ref[...].astype(jnp.float32).reshape(TB * L, E)            # (TB*L, E)

    # ----- attention branch -----
    xn = _layernorm(x, ln1_g_ref[...], ln1_b_ref[...])               # (TB*L, E)
    qkv = mm(xn, w_in, b_in_ref[...])                                # (TB*L, 3E)
    q, k, v = qkv[:, :E], qkv[:, E:2 * E], qkv[:, 2 * E:]

    # Head-major (H*TB, L, Dh) batched tensors; per-head lane slices plus
    # leading-dim reshapes avoid unsupported minor-dim reshapes in Mosaic.
    # TODO(synk): a lane-dim reshape (TB*L,E)->(TB*L,H,Dh) would avoid the
    #             per-head lane slices, but minor-dim reshapes are not
    #             reliably lowered, so we slice + stack instead.
    def split(t):
        return jnp.stack(
            [t[:, h * Dh:(h + 1) * Dh].reshape(TB, L, Dh) for h in range(H)],
            axis=0).reshape(H * TB, L, Dh)

    qh, kh, vh = split(q), split(k), split(v)                        # (H*TB,L,Dh)

    s = jnp.einsum('bld,bmd->blm', qh.astype(mm_dt), kh.astype(mm_dt),
                   preferred_element_type=jnp.float32)               # (H*TB,L,L)
    s = s - jnp.max(s, axis=-1, keepdims=True)
    p = jnp.exp(s)
    p = p * pl.reciprocal(jnp.sum(p, axis=-1, keepdims=True), approx=True)
    ctx = jnp.einsum('blm,bmd->bld', p.astype(mm_dt), vh.astype(mm_dt),
                     preferred_element_type=jnp.float32)             # (H*TB,L,Dh)

    attn = jnp.concatenate(
        [ctx[h * TB:(h + 1) * TB].reshape(TB * L, Dh) for h in range(H)],
        axis=-1)                                                     # (TB*L, E)

    attn = mm(attn, w_out, b_out_ref[...])
    x1 = x + attn                                                    # residual 1

    # ----- MLP branch -----
    xn2 = _layernorm(x1, ln2_g_ref[...], ln2_b_ref[...])
    h1 = mm(xn2, w_fc, b_fc_ref[...])                                # (TB*L, 4E)
    h1 = h1 * jax.nn.sigmoid(1.702 * h1)                             # QuickGELU
    mlp = mm(h1, w_proj, b_proj_ref[...])
    out = x1 + mlp                                                   # residual 2

    o_ref[...] = out.reshape(TB, L, E).astype(o_ref.dtype)


def _pick_batch_block(n, cap=8):
    for tb in (8, 4, 2, 1):
        if tb <= cap and n % tb == 0:
            return tb
    return 1


def residual_attention_block(x, params, n_head, *, matmul_dtype=jnp.float32):
    """x: (L, N, E) seq-first, like nn.MultiheadAttention."""
    L, N, E = x.shape
    xb = jnp.transpose(x, (1, 0, 2))                         # (N, L, E)

    # Fold the attention scale into W_q / b_q (scale-after-bias == scaling both).
    scale = 1.0 / math.sqrt(E // n_head)
    col_scale = jnp.concatenate(
        [jnp.full((E,), scale, jnp.float32), jnp.ones((2 * E,), jnp.float32)])

    row = lambda a: a.reshape(1, -1).astype(jnp.float32)     # 2-D biases / LN
    wt = lambda w: w.T.astype(matmul_dtype)                  # host-side transpose

    w_in_t = (params["w_in"] * col_scale[:, None]).T.astype(matmul_dtype)  # (E,3E)
    b_in_s = params["b_in"] * col_scale

    args = (
        xb,
        row(params["ln1_g"]), row(params["ln1_b"]),
        w_in_t, row(b_in_s),
        wt(params["w_out"]), row(params["b_out"]),
        row(params["ln2_g"]), row(params["ln2_b"]),
        wt(params["w_fc"]), row(params["b_fc"]),
        wt(params["w_proj"]), row(params["b_proj"]),
    )

    tb = _pick_batch_block(N)
    grid = (N // tb,)

    full = lambda a: pl.BlockSpec(a.shape, lambda b: (0,) * a.ndim)
    in_specs = [pl.BlockSpec((tb, L, E), lambda b: (b, 0, 0))]
    in_specs += [full(a) for a in args[1:]]

    # Explicit VMEM budget: resident (grid-invariant) params + double-buffered
    # batch tiles + headroom, clamped to a limit that is safe on v7x (64 MiB).
    param_bytes = sum(int(a.size) * a.dtype.itemsize for a in args[1:])
    io_bytes = tb * L * E * x.dtype.itemsize
    vmem_limit = int(min(64 * 2**20,
                         max(32 * 2**20,
                             2 * param_bytes + 4 * io_bytes + (8 << 20))))

    out = pl.pallas_call(
        functools.partial(_block_kernel, n_head=n_head, batch_block=tb,
                          matmul_dtype=matmul_dtype),
        out_shape=jax.ShapeDtypeStruct((N, L, E), x.dtype),
        grid_spec=pltpu.PrefetchScalarGridSpec(
            num_scalar_prefetch=0,
            grid=grid,
            in_specs=in_specs,
            out_specs=pl.BlockSpec((tb, L, E), lambda b: (b, 0, 0)),
        ),
        compiler_params=pltpu.CompilerParams(
            dimension_semantics=("parallel",),
            vmem_limit_bytes=vmem_limit,
        ),
    )(*args)
    return jnp.transpose(out, (1, 0, 2))                     # back to (L, N, E)


def _reference(x, p, n_head):
    # Pure-JAX reference for verification (PyTorch-layout weights).
    L, N, E = x.shape
    Dh = E // n_head

    def ln(v, g, b):
        mu = jnp.mean(v, -1, keepdims=True)
        var = jnp.mean((v - mu) ** 2, -1, keepdims=True)
        return (v - mu) / jnp.sqrt(var + 1e-5) * g + b

    xn = ln(x, p["ln1_g"], p["ln1_b"])
    qkv = jnp.einsum("lne,fe->lnf", xn, p["w_in"]) + p["b_in"]
    q, k, v = jnp.split(qkv, 3, axis=-1)
    q = q * (Dh ** -0.5)

    def heads(t):  # (L, N, E) -> (N, H, L, Dh)
        return t.reshape(L, N, n_head, Dh).transpose(1, 2, 0, 3)

    qh, kh, vh = heads(q), heads(k), heads(v)
    s = jnp.einsum("nhld,nhmd->nhlm", qh, kh)
    pmat = jax.nn.softmax(s, axis=-1)
    o = jnp.einsum("nhlm,nhmd->nhld", pmat, vh)              # (N, H, L, Dh)
    o = o.transpose(2, 0, 1, 3).reshape(L, N, E)
    attn = jnp.einsum("lne,fe->lnf", o, p["w_out"]) + p["b_out"]
    x1 = x + attn
    xn2 = ln(x1, p["ln2_g"], p["ln2_b"])
    h = jnp.einsum("lne,fe->lnf", xn2, p["w_fc"]) + p["b_fc"]
    h = h * jax.nn.sigmoid(1.702 * h)
    mlp = jnp.einsum("lnf,ef->lne", h, p["w_proj"]) + p["b_proj"]
    return x1 + mlp


def make_params(key, d_model):
    ks = jax.random.split(key, 8)
    s = 0.02
    return {
        "ln1_g": jnp.ones((d_model,), jnp.float32),
        "ln1_b": jnp.zeros((d_model,), jnp.float32),
        "w_in": s * jax.random.normal(ks[0], (3 * d_model, d_model), jnp.float32),
        "b_in": s * jax.random.normal(ks[1], (3 * d_model,), jnp.float32),
        "w_out": s * jax.random.normal(ks[2], (d_model, d_model), jnp.float32),
        "b_out": s * jax.random.normal(ks[3], (d_model,), jnp.float32),
        "ln2_g": jnp.ones((d_model,), jnp.float32),
        "ln2_b": jnp.zeros((d_model,), jnp.float32),
        "w_fc": s * jax.random.normal(ks[4], (4 * d_model, d_model), jnp.float32),
        "b_fc": s * jax.random.normal(ks[5], (4 * d_model,), jnp.float32),
        "w_proj": s * jax.random.normal(ks[6], (d_model, 4 * d_model), jnp.float32),
        "b_proj": s * jax.random.normal(ks[7], (d_model,), jnp.float32),
    }


if __name__ == "__main__":
    L, N, d_model, n_head = 8, 2, 32, 4
    key = jax.random.PRNGKey(0)
    kx, kp = jax.random.split(key)
    x = jax.random.normal(kx, (L, N, d_model), jnp.float32)
    params = make_params(kp, d_model)

    ref = _reference(x, params, n_head)

    # f32 matmul-operand path.
    out = residual_attention_block(x, params, n_head)
    out = jax.block_until_ready(out)
    assert out.shape == (L, N, d_model)
    assert jnp.allclose(out, ref, atol=1e-3, rtol=1e-3), \
        float(jnp.max(jnp.abs(out - ref)))

    # bf16 matmul-operand path (MXU peak dtype); accumulation stays f32.
    out_bf16 = residual_attention_block(x, params, n_head,
                                        matmul_dtype=jnp.bfloat16)
    out_bf16 = jax.block_until_ready(out_bf16)
    assert jnp.allclose(out_bf16, ref, atol=3e-2, rtol=3e-2), \
        float(jnp.max(jnp.abs(out_bf16 - ref)))

    print("KERNEL_OK")
</pallas_src>

<mosaic_0001>
module attributes {stable_mosaic.version = 11 : i64} {
  func.func @_block_kernel(%arg0: i32, %arg1: memref<2x8x32xf32, #tpu.memory_space<vmem>>, %arg2: memref<1x32xf32, #tpu.memory_space<vmem>>, %arg3: memref<1x32xf32, #tpu.memory_space<vmem>>, %arg4: memref<32x96xf32, #tpu.memory_space<vmem>>, %arg5: memref<1x96xf32, #tpu.memory_space<vmem>>, %arg6: memref<32x32xf32, #tpu.memory_space<vmem>>, %arg7: memref<1x32xf32, #tpu.memory_space<vmem>>, %arg8: memref<1x32xf32, #tpu.memory_space<vmem>>, %arg9: memref<1x32xf32, #tpu.memory_space<vmem>>, %arg10: memref<32x128xf32, #tpu.memory_space<vmem>>, %arg11: memref<1x128xf32, #tpu.memory_space<vmem>>, %arg12: memref<128x32xf32, #tpu.memory_space<vmem>>, %arg13: memref<1x32xf32, #tpu.memory_space<vmem>>, %arg14: memref<2x8x32xf32, #tpu.memory_space<vmem>>) attributes {dimension_semantics = [#tpu.dimension_semantics<parallel>], iteration_bounds = array<i64: 1>, scalar_prefetch = 0 : i64, scratch_operands = 0 : i64, tpu.core_type = #tpu.core_type<tc>, window_params = [{transform_indices = @transform_0, window_bounds = array<i64: 2, 8, 32>}, {pipeline_mode = #tpu.pipeline_mode<synchronous>, transform_indices = @transform_1, window_bounds = array<i64: 1, 32>}, {pipeline_mode = #tpu.pipeline_mode<synchronous>, transform_indices = @transform_2, window_bounds = array<i64: 1, 32>}, {pipeline_mode = #tpu.pipeline_mode<synchronous>, transform_indices = @transform_3, window_bounds = array<i64: 32, 96>}, {pipeline_mode = #tpu.pipeline_mode<synchronous>, transform_indices = @transform_4, window_bounds = array<i64: 1, 96>}, {pipeline_mode = #tpu.pipeline_mode<synchronous>, transform_indices = @transform_5, window_bounds = array<i64: 32, 32>}, {pipeline_mode = #tpu.pipeline_mode<synchronous>, transform_indices = @transform_6, window_bounds = array<i64: 1, 32>}, {pipeline_mode = #tpu.pipeline_mode<synchronous>, transform_indices = @transform_7, window_bounds = array<i64: 1, 32>}, {pipeline_mode = #tpu.pipeline_mode<synchronous>, transform_indices = @transform_8, window_bounds = array<i64: 1, 32>}, {pipeline_mode = #tpu.pipeline_mode<synchronous>, transform_indices = @transform_9, window_bounds = array<i64: 32, 128>}, {pipeline_mode = #tpu.pipeline_mode<synchronous>, transform_indices = @transform_10, window_bounds = array<i64: 1, 128>}, {pipeline_mode = #tpu.pipeline_mode<synchronous>, transform_indices = @transform_11, window_bounds = array<i64: 128, 32>}, {pipeline_mode = #tpu.pipeline_mode<synchronous>, transform_indices = @transform_12, window_bounds = array<i64: 1, 32>}, {transform_indices = @transform_13, window_bounds = array<i64: 2, 8, 32>}]} {
    %c0 = arith.constant 0 : index
    %c0_0 = arith.constant 0 : index
    %0 = vector.load %arg4[%c0, %c0_0] : memref<32x96xf32, #tpu.memory_space<vmem>>, vector<32x96xf32>
    %c0_1 = arith.constant 0 : index
    %c0_2 = arith.constant 0 : index
    %1 = vector.load %arg6[%c0_1, %c0_2] : memref<32x32xf32, #tpu.memory_space<vmem>>, vector<32x32xf32>
    %c0_3 = arith.constant 0 : index
    %c0_4 = arith.constant 0 : index
    %2 = vector.load %arg10[%c0_3, %c0_4] : memref<32x128xf32, #tpu.memory_space<vmem>>, vector<32x128xf32>
    %c0_5 = arith.constant 0 : index
    %c0_6 = arith.constant 0 : index
    %3 = vector.load %arg12[%c0_5, %c0_6] : memref<128x32xf32, #tpu.memory_space<vmem>>, vector<128x32xf32>
    %c0_7 = arith.constant 0 : index
    %c0_8 = arith.constant 0 : index
    %c0_9 = arith.constant 0 : index
    %4 = vector.load %arg1[%c0_7, %c0_8, %c0_9] : memref<2x8x32xf32, #tpu.memory_space<vmem>>, vector<2x8x32xf32>
    %5 = vector.shape_cast %4 : vector<2x8x32xf32> to vector<16x32xf32>
    %c0_10 = arith.constant 0 : index
    %c0_11 = arith.constant 0 : index
    %6 = vector.load %arg2[%c0_10, %c0_11] : memref<1x32xf32, #tpu.memory_space<vmem>>, vector<1x32xf32>
    %c0_12 = arith.constant 0 : index
    %c0_13 = arith.constant 0 : index
    %7 = vector.load %arg3[%c0_12, %c0_13] : memref<1x32xf32, #tpu.memory_space<vmem>>, vector<1x32xf32>
    %cst = arith.constant dense<0.000000e+00> : vector<16xf32>
    %8 = vector.multi_reduction <add>, %5, %cst [1] : vector<16x32xf32> to vector<16xf32>
    %9 = vector.shape_cast %8 : vector<16xf32> to vector<16x1xf32>
    %cst_14 = arith.constant 3.200000e+01 : f32
    %10 = vector.broadcast %cst_14 : f32 to vector<16x1xf32>
    %11 = arith.divf %9, %10 : vector<16x1xf32>
    %12 = vector.broadcast %11 : vector<16x1xf32> to vector<16x32xf32>
    %13 = arith.subf %5, %12 : vector<16x32xf32>
    %14 = arith.mulf %13, %13 : vector<16x32xf32>
    %cst_15 = arith.constant dense<0.000000e+00> : vector<16xf32>
    %15 = vector.multi_reduction <add>, %14, %cst_15 [1] : vector<16x32xf32> to vector<16xf32>
    %16 = vector.shape_cast %15 : vector<16xf32> to vector<16x1xf32>
    %cst_16 = arith.constant 3.200000e+01 : f32
    %17 = vector.broadcast %cst_16 : f32 to vector<16x1xf32>
    %18 = arith.divf %16, %17 : vector<16x1xf32>
    %19 = vector.broadcast %11 : vector<16x1xf32> to vector<16x32xf32>
    %20 = arith.subf %5, %19 : vector<16x32xf32>
    %cst_17 = arith.constant 9.99999974E-6 : f32
    %21 = vector.broadcast %cst_17 : f32 to vector<16x1xf32>
    %22 = arith.addf %18, %21 : vector<16x1xf32>
    %23 = math.rsqrt %22 : vector<16x1xf32>
    %24 = vector.broadcast %23 : vector<16x1xf32> to vector<16x32xf32>
    %25 = arith.mulf %20, %24 : vector<16x32xf32>
    %26 = vector.broadcast %6 : vector<1x32xf32> to vector<16x32xf32>
    %27 = arith.mulf %25, %26 : vector<16x32xf32>
    %28 = vector.broadcast %7 : vector<1x32xf32> to vector<16x32xf32>
    %29 = arith.addf %27, %28 : vector<16x32xf32>
    %c0_18 = arith.constant 0 : index
    %c0_19 = arith.constant 0 : index
    %30 = vector.load %arg5[%c0_18, %c0_19] : memref<1x96xf32, #tpu.memory_space<vmem>>, vector<1x96xf32>
    %cst_20 = arith.constant dense<0.000000e+00> : vector<16x96xf32>
    %31 = tpu.matmul %29, %0, %cst_20 {dimension_numbers = #tpu.dot_dimension_numbers<[1], [0], [0], [1], [0, 0, 1, 1], [], []>} : vector<16x32xf32>, vector<32x96xf32>, vector<16x96xf32> -> vector<16x96xf32>
    %32 = vector.broadcast %30 : vector<1x96xf32> to vector<16x96xf32>
    %33 = arith.addf %31, %32 : vector<16x96xf32>
    %34 = vector.extract_strided_slice %33 {offsets = [0, 0], sizes = [16, 32], strides = [1, 1]} : vector<16x96xf32> to vector<16x32xf32>
    %35 = vector.extract_strided_slice %33 {offsets = [0, 32], sizes = [16, 32], strides = [1, 1]} : vector<16x96xf32> to vector<16x32xf32>
    %36 = vector.extract_strided_slice %33 {offsets = [0, 64], sizes = [16, 32], strides = [1, 1]} : vector<16x96xf32> to vector<16x32xf32>
    %37 = vector.extract_strided_slice %34 {offsets = [0, 0], sizes = [16, 8], strides = [1, 1]} : vector<16x32xf32> to vector<16x8xf32>
    %38 = vector.shape_cast %37 : vector<16x8xf32> to vector<2x8x8xf32>
    %39 = vector.extract_strided_slice %34 {offsets = [0, 8], sizes = [16, 8], strides = [1, 1]} : vector<16x32xf32> to vector<16x8xf32>
    %40 = vector.shape_cast %39 : vector<16x8xf32> to vector<2x8x8xf32>
    %41 = vector.extract_strided_slice %34 {offsets = [0, 16], sizes = [16, 8], strides = [1, 1]} : vector<16x32xf32> to vector<16x8xf32>
    %42 = vector.shape_cast %41 : vector<16x8xf32> to vector<2x8x8xf32>
    %43 = vector.extract_strided_slice %34 {offsets = [0, 24], sizes = [16, 8], strides = [1, 1]} : vector<16x32xf32> to vector<16x8xf32>
    %44 = vector.shape_cast %43 : vector<16x8xf32> to vector<2x8x8xf32>
    %45 = vector.shape_cast %38 : vector<2x8x8xf32> to vector<1x2x8x8xf32>
    %46 = vector.shape_cast %40 : vector<2x8x8xf32> to vector<1x2x8x8xf32>
    %47 = vector.shape_cast %42 : vector<2x8x8xf32> to vector<1x2x8x8xf32>
    %48 = vector.shape_cast %44 : vector<2x8x8xf32> to vector<1x2x8x8xf32>
    %49 = tpu.concatenate %45, %46, %47, %48 in 0 : vector<1x2x8x8xf32>, vector<1x2x8x8xf32>, vector<1x2x8x8xf32>, vector<1x2x8x8xf32> -> vector<4x2x8x8xf32>
    %50 = vector.shape_cast %49 : vector<4x2x8x8xf32> to vector<8x8x8xf32>
    %51 = vector.extract_strided_slice %35 {offsets = [0, 0], sizes = [16, 8], strides = [1, 1]} : vector<16x32xf32> to vector<16x8xf32>
    %52 = vector.shape_cast %51 : vector<16x8xf32> to vector<2x8x8xf32>
    %53 = vector.extract_strided_slice %35 {offsets = [0, 8], sizes = [16, 8], strides = [1, 1]} : vector<16x32xf32> to vector<16x8xf32>
    %54 = vector.shape_cast %53 : vector<16x8xf32> to vector<2x8x8xf32>
    %55 = vector.extract_strided_slice %35 {offsets = [0, 16], sizes = [16, 8], strides = [1, 1]} : vector<16x32xf32> to vector<16x8xf32>
    %56 = vector.shape_cast %55 : vector<16x8xf32> to vector<2x8x8xf32>
    %57 = vector.extract_strided_slice %35 {offsets = [0, 24], sizes = [16, 8], strides = [1, 1]} : vector<16x32xf32> to vector<16x8xf32>
    %58 = vector.shape_cast %57 : vector<16x8xf32> to vector<2x8x8xf32>
    %59 = vector.shape_cast %52 : vector<2x8x8xf32> to vector<1x2x8x8xf32>
    %60 = vector.shape_cast %54 : vector<2x8x8xf32> to vector<1x2x8x8xf32>
    %61 = vector.shape_cast %56 : vector<2x8x8xf32> to vector<1x2x8x8xf32>
    %62 = vector.shape_cast %58 : vector<2x8x8xf32> to vector<1x2x8x8xf32>
    %63 = tpu.concatenate %59, %60, %61, %62 in 0 : vector<1x2x8x8xf32>, vector<1x2x8x8xf32>, vector<1x2x8x8xf32>, vector<1x2x8x8xf32> -> vector<4x2x8x8xf32>
    %64 = vector.shape_cast %63 : vector<4x2x8x8xf32> to vector<8x8x8xf32>
    %65 = vector.extract_strided_slice %36 {offsets = [0, 0], sizes = [16, 8], strides = [1, 1]} : vector<16x32xf32> to vector<16x8xf32>
    %66 = vector.shape_cast %65 : vector<16x8xf32> to vector<2x8x8xf32>
    %67 = vector.extract_strided_slice %36 {offsets = [0, 8], sizes = [16, 8], strides = [1, 1]} : vector<16x32xf32> to vector<16x8xf32>
    %68 = vector.shape_cast %67 : vector<16x8xf32> to vector<2x8x8xf32>
    %69 = vector.extract_strided_slice %36 {offsets = [0, 16], sizes = [16, 8], strides = [1, 1]} : vector<16x32xf32> to vector<16x8xf32>
    %70 = vector.shape_cast %69 : vector<16x8xf32> to vector<2x8x8xf32>
    %71 = vector.extract_strided_slice %36 {offsets = [0, 24], sizes = [16, 8], strides = [1, 1]} : vector<16x32xf32> to vector<16x8xf32>
    %72 = vector.shape_cast %71 : vector<16x8xf32> to vector<2x8x8xf32>
    %73 = vector.shape_cast %66 : vector<2x8x8xf32> to vector<1x2x8x8xf32>
    %74 = vector.shape_cast %68 : vector<2x8x8xf32> to vector<1x2x8x8xf32>
    %75 = vector.shape_cast %70 : vector<2x8x8xf32> to vector<1x2x8x8xf32>
    %76 = vector.shape_cast %72 : vector<2x8x8xf32> to vector<1x2x8x8xf32>
    %77 = tpu.concatenate %73, %74, %75, %76 in 0 : vector<1x2x8x8xf32>, vector<1x2x8x8xf32>, vector<1x2x8x8xf32>, vector<1x2x8x8xf32> -> vector<4x2x8x8xf32>
    %78 = vector.shape_cast %77 : vector<4x2x8x8xf32> to vector<8x8x8xf32>
    "tpu.trace_start"() <{level = 10 : i32, message = "bld,bmd->blm"}> : () -> ()
    %cst_21 = arith.constant dense<0.000000e+00> : vector<8x8x8xf32>
    %79 = tpu.matmul %50, %64, %cst_21 {dimension_numbers = #tpu.dot_dimension_numbers<[2], [2], [1], [1], [0, 0, 0, 1, 1, 1], [0], [0]>} : vector<8x8x8xf32>, vector<8x8x8xf32>, vector<8x8x8xf32> -> vector<8x8x8xf32>
    "tpu.trace_stop"() : () -> ()
    %cst_22 = arith.constant dense<0xFF800000> : vector<8x8xf32>
    %80 = vector.multi_reduction <maximumf>, %79, %cst_22 [2] : vector<8x8x8xf32> to vector<8x8xf32>
    %81 = vector.shape_cast %80 : vector<8x8xf32> to vector<8x8x1xf32>
    %82 = vector.broadcast %81 : vector<8x8x1xf32> to vector<8x8x8xf32>
    %83 = arith.subf %79, %82 : vector<8x8x8xf32>
    %84 = math.exp %83 : vector<8x8x8xf32>
    %cst_23 = arith.constant dense<0.000000e+00> : vector<8x8xf32>
    %85 = vector.multi_reduction <add>, %84, %cst_23 [2] : vector<8x8x8xf32> to vector<8x8xf32>
    %86 = vector.shape_cast %85 : vector<8x8xf32> to vector<8x8x1xf32>
    %87 = tpu.reciprocal %86 {approx = true} : vector<8x8x1xf32> -> vector<8x8x1xf32>
    %88 = vector.broadcast %87 : vector<8x8x1xf32> to vector<8x8x8xf32>
    %89 = arith.mulf %84, %88 : vector<8x8x8xf32>
    "tpu.trace_start"() <{level = 10 : i32, message = "blm,bmd->bld"}> : () -> ()
    %cst_24 = arith.constant dense<0.000000e+00> : vector<8x8x8xf32>
    %90 = tpu.matmul %89, %78, %cst_24 {dimension_numbers = #tpu.dot_dimension_numbers<[2], [1], [1], [2], [0, 0, 0, 1, 1, 2], [0], [0]>} : vector<8x8x8xf32>, vector<8x8x8xf32>, vector<8x8x8xf32> -> vector<8x8x8xf32>
    "tpu.trace_stop"() : () -> ()
    %91 = vector.extract_strided_slice %90 {offsets = [0, 0, 0], sizes = [2, 8, 8], strides = [1, 1, 1]} : vector<8x8x8xf32> to vector<2x8x8xf32>
    %92 = vector.shape_cast %91 : vector<2x8x8xf32> to vector<16x8xf32>
    %93 = vector.extract_strided_slice %90 {offsets = [2, 0, 0], sizes = [2, 8, 8], strides = [1, 1, 1]} : vector<8x8x8xf32> to vector<2x8x8xf32>
    %94 = vector.shape_cast %93 : vector<2x8x8xf32> to vector<16x8xf32>
    %95 = vector.extract_strided_slice %90 {offsets = [4, 0, 0], sizes = [2, 8, 8], strides = [1, 1, 1]} : vector<8x8x8xf32> to vector<2x8x8xf32>
    %96 = vector.shape_cast %95 : vector<2x8x8xf32> to vector<16x8xf32>
    %97 = vector.extract_strided_slice %90 {offsets = [6, 0, 0], sizes = [2, 8, 8], strides = [1, 1, 1]} : vector<8x8x8xf32> to vector<2x8x8xf32>
    %98 = vector.shape_cast %97 : vector<2x8x8xf32> to vector<16x8xf32>
    %99 = tpu.concatenate %92, %94, %96, %98 in 1 : vector<16x8xf32>, vector<16x8xf32>, vector<16x8xf32>, vector<16x8xf32> -> vector<16x32xf32>
    %c0_25 = arith.constant 0 : index
    %c0_26 = arith.constant 0 : index
    %100 = vector.load %arg7[%c0_25, %c0_26] : memref<1x32xf32, #tpu.memory_space<vmem>>, vector<1x32xf32>
    %cst_27 = arith.constant dense<0.000000e+00> : vector<16x32xf32>
    %101 = tpu.matmul %99, %1, %cst_27 {dimension_numbers = #tpu.dot_dimension_numbers<[1], [0], [0], [1], [0, 0, 1, 1], [], []>} : vector<16x32xf32>, vector<32x32xf32>, vector<16x32xf32> -> vector<16x32xf32>
    %102 = vector.broadcast %100 : vector<1x32xf32> to vector<16x32xf32>
    %103 = arith.addf %101, %102 : vector<16x32xf32>
    %104 = arith.addf %5, %103 : vector<16x32xf32>
    %c0_28 = arith.constant 0 : index
    %c0_29 = arith.constant 0 : index
    %105 = vector.load %arg8[%c0_28, %c0_29] : memref<1x32xf32, #tpu.memory_space<vmem>>, vector<1x32xf32>
    %c0_30 = arith.constant 0 : index
    %c0_31 = arith.constant 0 : index
    %106 = vector.load %arg9[%c0_30, %c0_31] : memref<1x32xf32, #tpu.memory_space<vmem>>, vector<1x32xf32>
    %cst_32 = arith.constant dense<0.000000e+00> : vector<16xf32>
    %107 = vector.multi_reduction <add>, %104, %cst_32 [1] : vector<16x32xf32> to vector<16xf32>
    %108 = vector.shape_cast %107 : vector<16xf32> to vector<16x1xf32>
    %cst_33 = arith.constant 3.200000e+01 : f32
    %109 = vector.broadcast %cst_33 : f32 to vector<16x1xf32>
    %110 = arith.divf %108, %109 : vector<16x1xf32>
    %111 = vector.broadcast %110 : vector<16x1xf32> to vector<16x32xf32>
    %112 = arith.subf %104, %111 : vector<16x32xf32>
    %113 = arith.mulf %112, %112 : vector<16x32xf32>
    %cst_34 = arith.constant dense<0.000000e+00> : vector<16xf32>
    %114 = vector.multi_reduction <add>, %113, %cst_34 [1] : vector<16x32xf32> to vector<16xf32>
    %115 = vector.shape_cast %114 : vector<16xf32> to vector<16x1xf32>
    %cst_35 = arith.constant 3.200000e+01 : f32
    %116 = vector.broadcast %cst_35 : f32 to vector<16x1xf32>
    %117 = arith.divf %115, %116 : vector<16x1xf32>
    %118 = vector.broadcast %110 : vector<16x1xf32> to vector<16x32xf32>
    %119 = arith.subf %104, %118 : vector<16x32xf32>
    %cst_36 = arith.constant 9.99999974E-6 : f32
    %120 = vector.broadcast %cst_36 : f32 to vector<16x1xf32>
    %121 = arith.addf %117, %120 : vector<16x1xf32>
    %122 = math.rsqrt %121 : vector<16x1xf32>
    %123 = vector.broadcast %122 : vector<16x1xf32> to vector<16x32xf32>
    %124 = arith.mulf %119, %123 : vector<16x32xf32>
    %125 = vector.broadcast %105 : vector<1x32xf32> to vector<16x32xf32>
    %126 = arith.mulf %124, %125 : vector<16x32xf32>
    %127 = vector.broadcast %106 : vector<1x32xf32> to vector<16x32xf32>
    %128 = arith.addf %126, %127 : vector<16x32xf32>
    %c0_37 = arith.constant 0 : index
    %c0_38 = arith.constant 0 : index
    %129 = vector.load %arg11[%c0_37, %c0_38] : memref<1x128xf32, #tpu.memory_space<vmem>>, vector<1x128xf32>
    %cst_39 = arith.constant dense<0.000000e+00> : vector<16x128xf32>
    %130 = tpu.matmul %128, %2, %cst_39 {dimension_numbers = #tpu.dot_dimension_numbers<[1], [0], [0], [1], [0, 0, 1, 1], [], []>} : vector<16x32xf32>, vector<32x128xf32>, vector<16x128xf32> -> vector<16x128xf32>
    %131 = vector.broadcast %129 : vector<1x128xf32> to vector<16x128xf32>
    %132 = arith.addf %130, %131 : vector<16x128xf32>
    %cst_40 = arith.constant 1.702000e+00 : f32
    %133 = vector.broadcast %cst_40 : f32 to vector<16x128xf32>
    %134 = arith.mulf %133, %132 : vector<16x128xf32>
    %135 = arith.negf %134 : vector<16x128xf32>
    %136 = math.exp %135 : vector<16x128xf32>
    %cst_41 = arith.constant 1.000000e+00 : f32
    %137 = vector.broadcast %cst_41 : f32 to vector<16x128xf32>
    %138 = arith.addf %137, %136 : vector<16x128xf32>
    %139 = arith.divf %137, %138 : vector<16x128xf32>
    %140 = arith.mulf %132, %139 : vector<16x128xf32>
    %c0_42 = arith.constant 0 : index
    %c0_43 = arith.constant 0 : index
    %141 = vector.load %arg13[%c0_42, %c0_43] : memref<1x32xf32, #tpu.memory_space<vmem>>, vector<1x32xf32>
    %cst_44 = arith.constant dense<0.000000e+00> : vector<16x32xf32>
    %142 = tpu.matmul %140, %3, %cst_44 {dimension_numbers = #tpu.dot_dimension_numbers<[1], [0], [0], [1], [0, 0, 1, 1], [], []>} : vector<16x128xf32>, vector<128x32xf32>, vector<16x32xf32> -> vector<16x32xf32>
    %143 = vector.broadcast %141 : vector<1x32xf32> to vector<16x32xf32>
    %144 = arith.addf %142, %143 : vector<16x32xf32>
    %145 = arith.addf %104, %144 : vector<16x32xf32>
    %146 = vector.shape_cast %145 : vector<16x32xf32> to vector<2x8x32xf32>
    %c0_45 = arith.constant 0 : index
    %c0_46 = arith.constant 0 : index
    %c0_47 = arith.constant 0 : index
    %147 = vector.load %arg14[%c0_45, %c0_46, %c0_47] : memref<2x8x32xf32, #tpu.memory_space<vmem>>, vector<2x8x32xf32>
    tpu.vector_store %arg14[%c0_45, %c0_46, %c0_47], %146 {strides = array<i32>} : memref<2x8x32xf32, #tpu.memory_space<vmem>>, vector<2x8x32xf32>,
    return
  }
  func.func @transform_0(%arg0: i32) -> (i32, i32, i32) {
    %c0_i32 = arith.constant 0 : i32
    %c0_i32_0 = arith.constant 0 : i32
    %c0_i32_1 = arith.constant 0 : i32
    return %arg0, %c0_i32, %c0_i32_0 : i32, i32, i32
  }
  func.func @transform_1(%arg0: i32) -> (i32, i32) {
    %c0_i32 = arith.constant 0 : i32
    %c0_i32_0 = arith.constant 0 : i32
    %c0_i32_1 = arith.constant 0 : i32
    return %c0_i32, %c0_i32_0 : i32, i32
  }
  func.func @transform_2(%arg0: i32) -> (i32, i32) {
    %c0_i32 = arith.constant 0 : i32
    %c0_i32_0 = arith.constant 0 : i32
    %c0_i32_1 = arith.constant 0 : i32
    return %c0_i32, %c0_i32_0 : i32, i32
  }
  func.func @transform_3(%arg0: i32) -> (i32, i32) {
    %c0_i32 = arith.constant 0 : i32
    %c0_i32_0 = arith.constant 0 : i32
    %c0_i32_1 = arith.constant 0 : i32
    return %c0_i32, %c0_i32_0 : i32, i32
  }
  func.func @transform_4(%arg0: i32) -> (i32, i32) {
    %c0_i32 = arith.constant 0 : i32
    %c0_i32_0 = arith.constant 0 : i32
    %c0_i32_1 = arith.constant 0 : i32
    return %c0_i32, %c0_i32_0 : i32, i32
  }
  func.func @transform_5(%arg0: i32) -> (i32, i32) {
    %c0_i32 = arith.constant 0 : i32
    %c0_i32_0 = arith.constant 0 : i32
    %c0_i32_1 = arith.constant 0 : i32
    return %c0_i32, %c0_i32_0 : i32, i32
  }
  func.func @transform_6(%arg0: i32) -> (i32, i32) {
    %c0_i32 = arith.constant 0 : i32
    %c0_i32_0 = arith.constant 0 : i32
    %c0_i32_1 = arith.constant 0 : i32
    return %c0_i32, %c0_i32_0 : i32, i32
  }
  func.func @transform_7(%arg0: i32) -> (i32, i32) {
    %c0_i32 = arith.constant 0 : i32
    %c0_i32_0 = arith.constant 0 : i32
    %c0_i32_1 = arith.constant 0 : i32
    return %c0_i32, %c0_i32_0 : i32, i32
  }
  func.func @transform_8(%arg0: i32) -> (i32, i32) {
    %c0_i32 = arith.constant 0 : i32
    %c0_i32_0 = arith.constant 0 : i32
    %c0_i32_1 = arith.constant 0 : i32
    return %c0_i32, %c0_i32_0 : i32, i32
  }
  func.func @transform_9(%arg0: i32) -> (i32, i32) {
    %c0_i32 = arith.constant 0 : i32
    %c0_i32_0 = arith.constant 0 : i32
    %c0_i32_1 = arith.constant 0 : i32
    return %c0_i32, %c0_i32_0 : i32, i32
  }
  func.func @transform_10(%arg0: i32) -> (i32, i32) {
    %c0_i32 = arith.constant 0 : i32
    %c0_i32_0 = arith.constant 0 : i32
    %c0_i32_1 = arith.constant 0 : i32
    return %c0_i32, %c0_i32_0 : i32, i32
  }
  func.func @transform_11(%arg0: i32) -> (i32, i32) {
    %c0_i32 = arith.constant 0 : i32
    %c0_i32_0 = arith.constant 0 : i32
    %c0_i32_1 = arith.constant 0 : i32
    return %c0_i32, %c0_i32_0 : i32, i32
  }
  func.func @transform_12(%arg0: i32) -> (i32, i32) {
    %c0_i32 = arith.constant 0 : i32
    %c0_i32_0 = arith.constant 0 : i32
    %c0_i32_1 = arith.constant 0 : i32
    return %c0_i32, %c0_i32_0 : i32, i32
  }
  func.func @transform_13(%arg0: i32) -> (i32, i32, i32) {
    %c0_i32 = arith.constant 0 : i32
    %c0_i32_0 = arith.constant 0 : i32
    %c0_i32_1 = arith.constant 0 : i32
    return %arg0, %c0_i32, %c0_i32_0 : i32, i32, i32
  }
}

</mosaic_0001>

<llo_original>
// kernel: tpu_custom_call.1
$region0: #{tpu_custom_call.1}
  #allocation0 [shape = 'u32[]', space=smem, size = 0x4, offset = 0x4, fixed_abs, tag = 'smem constant byte address 0x4 - core index']
  #allocation1 [shape = 'u32[144,128]{1,0:T(1,128)}', space=vmem, size = 0x12000, scoped, tag = 'internal scratch']
  %s0 = inlined_call_operand.vmem [shape: f32[2,8,32], index: 0, kind: input, shape index: {}]
  %s1 = inlined_call_operand.vmem [shape: f32[1,32], index: 1, kind: input, shape index: {}]
  %s2 = inlined_call_operand.vmem [shape: f32[1,32], index: 2, kind: input, shape index: {}]
  %s3 = inlined_call_operand.vmem [shape: f32[32,96], index: 3, kind: input, shape index: {}]
  %s4 = inlined_call_operand.vmem [shape: f32[1,96], index: 4, kind: input, shape index: {}]
  %s5 = inlined_call_operand.vmem [shape: f32[32,32], index: 5, kind: input, shape index: {}]
  %s6 = inlined_call_operand.vmem [shape: f32[1,32], index: 6, kind: input, shape index: {}]
  %s7 = inlined_call_operand.vmem [shape: f32[1,32], index: 7, kind: input, shape index: {}]
  %s8 = inlined_call_operand.vmem [shape: f32[1,32], index: 8, kind: input, shape index: {}]
  %s9 = inlined_call_operand.vmem [shape: f32[32,128], index: 9, kind: input, shape index: {}]
  %s10 = inlined_call_operand.vmem [shape: f32[1,128], index: 10, kind: input, shape index: {}]
  %s11 = inlined_call_operand.vmem [shape: f32[128,32], index: 11, kind: input, shape index: {}]
  %s12 = inlined_call_operand.vmem [shape: f32[1,32], index: 12, kind: input, shape index: {}]
  %s13 = inlined_call_operand.hbm [shape: f32[2,8,32], index: 13, kind: output, shape index: {}]
  %s14 = sld [smem:[#allocation0]]
  $region62: #{tpu_custom_call.1} parent=0
    _
  %s16 = ssub.s32 1, %s14
  %s17 = scalar_select 0, %s16, %s14
  $region1: #{tpu_custom_call.1} parent=0
    #allocation2 [shape = 'u8[8192]{0}', space=vmem, size = 0x2000, scoped, tag = 'output window, operand 0, single buffered']
    #allocation3 [shape = 's32[1]{0}', space=sflag, size = 0x4, scoped, tag = 'scoped memory for tpu_custom_call.1']
    %18 = vsyncpa [#allocation3], 0
    // Predicated region
    $region2: #{tpu_custom_call.1} parent=1 // pred_check
      _
    $region3: #{tpu_custom_call.1} parent=1 // pred_check_branch
      %20 = sbr.rel (0) target = $region5
    $region4: #{tpu_custom_call.1} parent=1 // pred_region
      _
    $region5: #{tpu_custom_call.1} parent=1 // pred_fallthru
      _
    // Predicated region
    $region6: #{tpu_custom_call.1} parent=1 // pred_check
      _
    $region7: #{tpu_custom_call.1} parent=1 // pred_check_branch
      %22 = sbr.rel (0) target = $region9
    $region8: #{tpu_custom_call.1} parent=1 // pred_region
      _
    $region9: #{tpu_custom_call.1} parent=1 // pred_fallthru
      _
    // Predicated region
    $region10: #{tpu_custom_call.1} parent=1 // pred_check
      _
    $region11: #{tpu_custom_call.1} parent=1 // pred_check_branch
      %24 = sbr.rel (0) target = $region13
    $region12: #{tpu_custom_call.1} parent=1 // pred_region
      _
    $region13: #{tpu_custom_call.1} parent=1 // pred_fallthru
      _
    // Predicated region
    $region14: #{tpu_custom_call.1} parent=1 // pred_check
      _
    $region15: #{tpu_custom_call.1} parent=1 // pred_check_branch
      %26 = sbr.rel (0) target = $region17
    $region16: #{tpu_custom_call.1} parent=1 // pred_region
      _
    $region17: #{tpu_custom_call.1} parent=1 // pred_fallthru
      _
    // Predicated region
    $region18: #{tpu_custom_call.1} parent=1 // pred_check
      _
    $region19: #{tpu_custom_call.1} parent=1 // pred_check_branch
      %28 = sbr.rel (0) target = $region21
    $region20: #{tpu_custom_call.1} parent=1 // pred_region
      _
    $region21: #{tpu_custom_call.1} parent=1 // pred_fallthru
      _
    // Predicated region
    $region22: #{tpu_custom_call.1} parent=1 // pred_check
      _
    $region23: #{tpu_custom_call.1} parent=1 // pred_check_branch
      %30 = sbr.rel (0) target = $region25
    $region24: #{tpu_custom_call.1} parent=1 // pred_region
      _
    $region25: #{tpu_custom_call.1} parent=1 // pred_fallthru
      _
    // Predicated region
    $region26: #{tpu_custom_call.1} parent=1 // pred_check
      _
    $region27: #{tpu_custom_call.1} parent=1 // pred_check_branch
      %32 = sbr.rel (0) target = $region29
    $region28: #{tpu_custom_call.1} parent=1 // pred_region
      _
    $region29: #{tpu_custom_call.1} parent=1 // pred_fallthru
      _
    // Predicated region
    $region30: #{tpu_custom_call.1} parent=1 // pred_check
      _
    $region31: #{tpu_custom_call.1} parent=1 // pred_check_branch
      %34 = sbr.rel (0) target = $region33
    $region32: #{tpu_custom_call.1} parent=1 // pred_region
      _
    $region33: #{tpu_custom_call.1} parent=1 // pred_fallthru
      _
    // Predicated region
    $region34: #{tpu_custom_call.1} parent=1 // pred_check
      _
    $region35: #{tpu_custom_call.1} parent=1 // pred_check_branch
      %36 = sbr.rel (0) target = $region37
    $region36: #{tpu_custom_call.1} parent=1 // pred_region
      _
    $region37: #{tpu_custom_call.1} parent=1 // pred_fallthru
      _
    // Predicated region
    $region38: #{tpu_custom_call.1} parent=1 // pred_check
      _
    $region39: #{tpu_custom_call.1} parent=1 // pred_check_branch
      %38 = sbr.rel (0) target = $region41
    $region40: #{tpu_custom_call.1} parent=1 // pred_region
      _
    $region41: #{tpu_custom_call.1} parent=1 // pred_fallthru
      _
    // Predicated region
    $region42: #{tpu_custom_call.1} parent=1 // pred_check
      _
    $region43: #{tpu_custom_call.1} parent=1 // pred_check_branch
      %40 = sbr.rel (0) target = $region45
    $region44: #{tpu_custom_call.1} parent=1 // pred_region
      _
    $region45: #{tpu_custom_call.1} parent=1 // pred_fallthru
      _
    // Predicated region
    $region46: #{tpu_custom_call.1} parent=1 // pred_check
      _
    $region47: #{tpu_custom_call.1} parent=1 // pred_check_branch
      %42 = sbr.rel (0) target = $region49
    $region48: #{tpu_custom_call.1} parent=1 // pred_region
      _
    $region49: #{tpu_custom_call.1} parent=1 // pred_fallthru
      _
    // Predicated region
    $region50: #{tpu_custom_call.1} parent=1 // pred_check
      _
    $region51: #{tpu_custom_call.1} parent=1 // pred_check_branch
      %44 = sbr.rel (0) target = $region53
    $region52: #{tpu_custom_call.1} parent=1 // pred_region
      _
    $region53: #{tpu_custom_call.1} parent=1 // pred_fallthru
      _
    %v45 = vld [vmem:[%s3] sm:$0xff]
    %v46 = vld [vmem:[%s3 + $0x8] sm:$0xff]
    %v47 = vld [vmem:[%s3 + $0x10] sm:$0xff]
    %v48 = vld [vmem:[%s3 + $0x18] sm:$0xff]
    %v49 = vld [vmem:[%s5] sm:$0xff]
    %v50 = vld [vmem:[%s5 + $0x8] sm:$0xff]
    %v51 = vld [vmem:[%s5 + $0x10] sm:$0xff]
    %v52 = vld [vmem:[%s5 + $0x18] sm:$0xff]
    %v53 = vld [vmem:[%s9] sm:$0xff]
    %v54 = vld [vmem:[%s9 + $0x8] sm:$0xff]
    %v55 = vld [vmem:[%s9 + $0x10] sm:$0xff]
    %v56 = vld [vmem:[%s9 + $0x18] sm:$0xff]
    %v57 = vld [vmem:[%s11] sm:$0xff]
    %v58 = vld [vmem:[%s11 + $0x8] sm:$0xff]
    %v59 = vld [vmem:[%s11 + $0x10] sm:$0xff]
    %v60 = vld [vmem:[%s11 + $0x18] sm:$0xff]
    %v61 = vld [vmem:[%s11 + $0x20] sm:$0xff]
    %v62 = vld [vmem:[%s11 + $0x28] sm:$0xff]
    %v63 = vld [vmem:[%s11 + $0x30] sm:$0xff]
    %v64 = vld [vmem:[%s11 + $0x38] sm:$0xff]
    %v65 = vld [vmem:[%s11 + $0x40] sm:$0xff]
    %v66 = vld [vmem:[%s11 + $0x48] sm:$0xff]
    %v67 = vld [vmem:[%s11 + $0x50] sm:$0xff]
    %v68 = vld [vmem:[%s11 + $0x58] sm:$0xff]
    %v69 = vld [vmem:[%s11 + $0x60] sm:$0xff]
    %v70 = vld [vmem:[%s11 + $0x68] sm:$0xff]
    %v71 = vld [vmem:[%s11 + $0x70] sm:$0xff]
    %v72 = vld [vmem:[%s11 + $0x78] sm:$0xff]
    %v73 = vld [vmem:[%s0] sm:$0xff]
    %v74 = vld [vmem:[%s0 + $0x8] sm:$0xff]
    %v75 = vld [vmem:[%s1] sm:$0x1]
    %v76 = vld [vmem:[%s2] sm:$0x1]
    %vm77 = vcmask 261120
    %v78 = vsel %vm77, %v73, 0.0
    %79 = vadd.xlane.f32.xlu0 %v78
    %v80 = vpop.xlane.xlu0 %79
    %v81 = vsel %vm77, %v74, 0.0
    %82 = vadd.xlane.f32.xlu0 %v81
    %v83 = vpop.xlane.xlu0 %82
    %v84 = vrcp.pop 32.0
    %v85 = vmul.f32 %v80, %v84
    %v86 = vmul.f32 %v83, %v84
    %v87 = vsub.f32 %v73, %v85
    %v88 = vsub.f32 %v74, %v86
    %v89 = vmul.f32 %v87, %v87
    %v90 = vmul.f32 %v88, %v88
    %v91 = vsel %vm77, %v89, 0.0
    %92 = vadd.xlane.f32.xlu0 %v91
    %v93 = vpop.xlane.xlu0 %92
    %v94 = vsel %vm77, %v90, 0.0
    %95 = vadd.xlane.f32.xlu0 %v94
    %v96 = vpop.xlane.xlu0 %95
    %v97 = vmul.f32 %v93, %v84
    %v98 = vmul.f32 %v96, %v84
    %v99 = vadd.f32 %v97, 1e-05
    %v100 = vadd.f32 %v98, 1e-05
    %v101 = vrsqrt.pop %v99
    %v102 = vrsqrt.pop %v100
    %v103 = vmul.f32 %v87, %v101
    %v104 = vmul.f32 %v88, %v102
    %v106 = vlaneseq
    %v107 = vshrl.u32 %v106, 7
    %v108 = vsub.s32 0, %v107
    %v109 = vrot.slane %v75, %v108
    %v111 = vmul.f32 %v103, %v109
    %v112 = vmul.f32 %v104, %v109
    %v114 = vlaneseq
    %v115 = vshrl.u32 %v114, 7
    %v116 = vsub.s32 0, %v115
    %v117 = vrot.slane %v76, %v116
    %v119 = vadd.f32 %v111, %v117
    %v120 = vadd.f32 %v112, %v117
    %v121 = vld [vmem:[%s4] sm:$0x1]
    %v123 = vlaneseq
    %v124 = vshrl.u32 %v123, 7
    %v125 = vsub.s32 0, %v124
    %v126 = vrot.slane %v121, %v125
    %v129 = vsel %vm77, %v119, 0
    %v132 = vsel %vm77, %v120, 0
    %134 = vmatprep.subr.mxu0 0.0
    %135 = vmatpush1.msra.mxu0 0.0
    %136 = vmatprep.subr.mxu0 0.0
    %137 = vmatpush1.msra.mxu0 0.0
    %138 = vmatprep.subr.mxu0 0.0
    %139 = vmatpush1.msra.mxu0 0.0
    %140 = vmatprep.subr.mxu0 0.0
    %141 = vmatpush1.msra.mxu0 0.0
    %142 = vmatprep.subr.mxu0 0.0
    %143 = vmatpush1.msra.mxu0 0.0
    %144 = vmatprep.subr.mxu0 0.0
    %145 = vmatpush1.msra.mxu0 0.0
    %146 = vmatprep.subr.mxu0 0.0
    %147 = vmatpush1.msra.mxu0 0.0
    %148 = vmatprep.subr.mxu0 0.0
    %149 = vmatpush1.msra.mxu0 0.0
    %150 = vmatprep.subr.mxu0 0.0
    %151 = vmatpush1.msra.mxu0 0.0
    %152 = vmatprep.subr.mxu0 0.0
    %153 = vmatpush1.msra.mxu0 0.0
    %154 = vmatprep.subr.mxu0 0.0
    %155 = vmatpush1.msra.mxu0 0.0
    %156 = vmatprep.subr.mxu0 0.0
    %157 = vmatpush1.msra.mxu0 0.0
    %158 = vmatprep.subr.mxu0 0.0
    %159 = vmatpush1.msra.mxu0 %v48
    %160 = vmatprep.subr.mxu0 0.0
    %161 = vmatpush1.msra.mxu0 %v47
    %162 = vmatprep.subr.mxu0 0.0
    %163 = vmatpush1.msra.mxu0 %v46
    %164 = vmatprep.subr.mxu0 0.0
    %165 = vmatpush1.msra.mxu0 %v45
    %166 = vmatprep.subr.mxu0 0.0
    %167 = vmatpush2.msra.mxu0 0.0
    %168 = vmatprep.subr.mxu0 0.0
    %169 = vmatpush2.msra.mxu0 0.0
    %170 = vmatprep.subr.mxu0 0.0
    %171 = vmatpush2.msra.mxu0 0.0
    %172 = vmatprep.subr.mxu0 0.0
    %173 = vmatpush2.msra.mxu0 0.0
    %174 = vmatprep.subr.mxu0 0.0
    %175 = vmatpush2.msra.mxu0 0.0
    %176 = vmatprep.subr.mxu0 0.0
    %177 = vmatpush2.msra.mxu0 0.0
    %178 = vmatprep.subr.mxu0 0.0
    %179 = vmatpush2.msra.mxu0 0.0
    %180 = vmatprep.subr.mxu0 0.0
    %181 = vmatpush2.msra.mxu0 0.0
    %182 = vmatprep.subr.mxu0 0.0
    %183 = vmatpush2.msra.mxu0 0.0
    %184 = vmatprep.subr.mxu0 0.0
    %185 = vmatpush2.msra.mxu0 0.0
    %186 = vmatprep.subr.mxu0 0.0
    %187 = vmatpush2.msra.mxu0 0.0
    %188 = vmatprep.subr.mxu0 0.0
    %189 = vmatpush2.msra.mxu0 0.0
    %190 = vmatprep.subr.mxu0 0.0
    %191 = vmatpush2.msra.mxu0 0.0
    %192 = vmatprep.subr.mxu0 0.0
    %193 = vmatpush2.msra.mxu0 0.0
    %194 = vmatprep.subr.mxu0 0.0
    %195 = vmatpush2.msra.mxu0 0.0
    %196 = vmatprep.subr.mxu0 0.0
    %197 = vmatpush2.msra.mxu0 0.0
    %198 = vmatprep.mubr.f32.mxu0 0.0
    %199 = vmatmul.mubr.f32.gmra.mxu0 %v129
    %v200 = vpop.f32.mrf.mxu0
    %v201 = vadd.f32 %v126, %v200
    %v202 = vpop.f32.mrf.mxu0
    %203 = vmatprep.mubr.f32.mxu0 0.0
    %204 = vmatmul.mubr.f32.gmra.mxu0 %v132
    %v205 = vpop.f32.mrf.mxu0
    %v206 = vadd.f32 %v126, %v205
    %v207 = vpop.f32.mrf.mxu0
    %208 = vdwg.mxu0
    %211 = vrot.lane.b32.xlu0 %v201, 120
    %v212 = vpop.permute.xlu0 %211
    %213 = vrot.lane.b32.xlu0 %v206, 120
    %v214 = vpop.permute.xlu0 %213
    %215 = vrot.lane.b32.xlu0 %v201, 112
    %v216 = vpop.permute.xlu0 %215
    %217 = vrot.lane.b32.xlu0 %v206, 112
    %v218 = vpop.permute.xlu0 %217
    %219 = vrot.lane.b32.xlu0 %v201, 104
    %v220 = vpop.permute.xlu0 %219
    %221 = vrot.lane.b32.xlu0 %v206, 104
    %v222 = vpop.permute.xlu0 %221
    %223 = vrot.lane.b32.xlu0 %v201, 96
    %v224 = vpop.permute.xlu0 %223
    %vm225 = vcmask 64512
    %v226 = vsel %vm225, %v201, 0
    %v228 = vsel %vm225, %v224, 0
    %230 = vmatprep.subr.mxu0 0.0
    %231 = vmatpush1.xpose.msra.mxu0 0.0
    %232 = vmatprep.subr.mxu0 0.0
    %233 = vmatpush1.xpose.msra.mxu0 0.0
    %234 = vmatprep.subr.mxu0 0.0
    %235 = vmatpush1.xpose.msra.mxu0 0.0
    %236 = vmatprep.subr.mxu0 0.0
    %237 = vmatpush1.xpose.msra.mxu0 0.0
    %238 = vmatprep.subr.mxu0 0.0
    %239 = vmatpush1.xpose.msra.mxu0 0.0
    %240 = vmatprep.subr.mxu0 0.0
    %241 = vmatpush1.xpose.msra.mxu0 0.0
    %242 = vmatprep.subr.mxu0 0.0
    %243 = vmatpush1.xpose.msra.mxu0 0.0
    %244 = vmatprep.subr.mxu0 0.0
    %245 = vmatpush1.xpose.msra.mxu0 0.0
    %246 = vmatprep.subr.mxu0 0.0
    %247 = vmatpush1.xpose.msra.mxu0 0.0
    %248 = vmatprep.subr.mxu0 0.0
    %249 = vmatpush1.xpose.msra.mxu0 0.0
    %250 = vmatprep.subr.mxu0 0.0
    %251 = vmatpush1.xpose.msra.mxu0 0.0
    %252 = vmatprep.subr.mxu0 0.0
    %253 = vmatpush1.xpose.msra.mxu0 0.0
    %254 = vmatprep.subr.mxu0 0.0
    %255 = vmatpush1.xpose.msra.mxu0 0.0
    %256 = vmatprep.subr.mxu0 0.0
    %257 = vmatpush1.xpose.msra.mxu0 0.0
    %258 = vmatprep.subr.mxu0 0.0
    %259 = vmatpush1.xpose.msra.mxu0 0.0
    %260 = vmatprep.subr.mxu0 0.0
    %261 = vmatpush1.xpose.msra.mxu0 %v228
    %262 = vmatprep.subr.mxu0 0.0
    %263 = vmatpush2.xpose.msra.mxu0 0.0
    %264 = vmatprep.subr.mxu0 0.0
    %265 = vmatpush2.xpose.msra.mxu0 0.0
    %266 = vmatprep.subr.mxu0 0.0
    %267 = vmatpush2.xpose.msra.mxu0 0.0
    %268 = vmatprep.subr.mxu0 0.0
    %269 = vmatpush2.xpose.msra.mxu0 0.0
    %270 = vmatprep.subr.mxu0 0.0
    %271 = vmatpush2.xpose.msra.mxu0 0.0
    %272 = vmatprep.subr.mxu0 0.0
    %273 = vmatpush2.xpose.msra.mxu0 0.0
    %274 = vmatprep.subr.mxu0 0.0
    %275 = vmatpush2.xpose.msra.mxu0 0.0
    %276 = vmatprep.subr.mxu0 0.0
    %277 = vmatpush2.xpose.msra.mxu0 0.0
    %278 = vmatprep.subr.mxu0 0.0
    %279 = vmatpush2.xpose.msra.mxu0 0.0
    %280 = vmatprep.subr.mxu0 0.0
    %281 = vmatpush2.xpose.msra.mxu0 0.0
    %282 = vmatprep.subr.mxu0 0.0
    %283 = vmatpush2.xpose.msra.mxu0 0.0
    %284 = vmatprep.subr.mxu0 0.0
    %285 = vmatpush2.xpose.msra.mxu0 0.0
    %286 = vmatprep.subr.mxu0 0.0
    %287 = vmatpush2.xpose.msra.mxu0 0.0
    %288 = vmatprep.subr.mxu0 0.0
    %289 = vmatpush2.xpose.msra.mxu0 0.0
    %290 = vmatprep.subr.mxu0 0.0
    %291 = vmatpush2.xpose.msra.mxu0 0.0
    %292 = vmatprep.subr.mxu0 0.0
    %293 = vmatpush2.xpose.msra.mxu0 0.0
    %294 = vmatprep.mubr.f32.mxu0 0.0
    %295 = vmatmul.mubr.f32.gmra.mxu0 %v226
    %v296 = vpop.f32.mrf.mxu0
    %v297 = vadd.f32 0.0, %v296
    %v298 = vpop.f32.mrf.mxu0
    %299 = vdwg.mxu0
    %300 = vrot.lane.b32.xlu0 %v206, 96
    %v301 = vpop.permute.xlu0 %300
    %v302 = vsel %vm225, %v206, 0
    %v304 = vsel %vm225, %v301, 0
    %306 = vmatprep.subr.mxu0 0.0
    %307 = vmatpush1.xpose.msra.mxu0 0.0
    %308 = vmatprep.subr.mxu0 0.0
    %309 = vmatpush1.xpose.msra.mxu0 0.0
    %310 = vmatprep.subr.mxu0 0.0
    %311 = vmatpush1.xpose.msra.mxu0 0.0
    %312 = vmatprep.subr.mxu0 0.0
    %313 = vmatpush1.xpose.msra.mxu0 0.0
    %314 = vmatprep.subr.mxu0 0.0
    %315 = vmatpush1.xpose.msra.mxu0 0.0
    %316 = vmatprep.subr.mxu0 0.0
    %317 = vmatpush1.xpose.msra.mxu0 0.0
    %318 = vmatprep.subr.mxu0 0.0
    %319 = vmatpush1.xpose.msra.mxu0 0.0
    %320 = vmatprep.subr.mxu0 0.0
    %321 = vmatpush1.xpose.msra.mxu0 0.0
    %322 = vmatprep.subr.mxu0 0.0
    %323 = vmatpush1.xpose.msra.mxu0 0.0
    %324 = vmatprep.subr.mxu0 0.0
    %325 = vmatpush1.xpose.msra.mxu0 0.0
    %326 = vmatprep.subr.mxu0 0.0
    %327 = vmatpush1.xpose.msra.mxu0 0.0
    %328 = vmatprep.subr.mxu0 0.0
    %329 = vmatpush1.xpose.msra.mxu0 0.0
    %330 = vmatprep.subr.mxu0 0.0
    %331 = vmatpush1.xpose.msra.mxu0 0.0
    %332 = vmatprep.subr.mxu0 0.0
    %333 = vmatpush1.xpose.msra.mxu0 0.0
    %334 = vmatprep.subr.mxu0 0.0
    %335 = vmatpush1.xpose.msra.mxu0 0.0
    %336 = vmatprep.subr.mxu0 0.0
    %337 = vmatpush1.xpose.msra.mxu0 %v304
    %338 = vmatprep.subr.mxu0 0.0
    %339 = vmatpush2.xpose.msra.mxu0 0.0
    %340 = vmatprep.subr.mxu0 0.0
    %341 = vmatpush2.xpose.msra.mxu0 0.0
    %342 = vmatprep.subr.mxu0 0.0
    %343 = vmatpush2.xpose.msra.mxu0 0.0
    %344 = vmatprep.subr.mxu0 0.0
    %345 = vmatpush2.xpose.msra.mxu0 0.0
    %346 = vmatprep.subr.mxu0 0.0
    %347 = vmatpush2.xpose.msra.mxu0 0.0
    %348 = vmatprep.subr.mxu0 0.0
    %349 = vmatpush2.xpose.msra.mxu0 0.0
    %350 = vmatprep.subr.mxu0 0.0
    %351 = vmatpush2.xpose.msra.mxu0 0.0
    %352 = vmatprep.subr.mxu0 0.0
    %353 = vmatpush2.xpose.msra.mxu0 0.0
    %354 = vmatprep.subr.mxu0 0.0
    %355 = vmatpush2.xpose.msra.mxu0 0.0
    %356 = vmatprep.subr.mxu0 0.0
    %357 = vmatpush2.xpose.msra.mxu0 0.0
    %358 = vmatprep.subr.mxu0 0.0
    %359 = vmatpush2.xpose.msra.mxu0 0.0
    %360 = vmatprep.subr.mxu0 0.0
    %361 = vmatpush2.xpose.msra.mxu0 0.0
    %362 = vmatprep.subr.mxu0 0.0
    %363 = vmatpush2.xpose.msra.mxu0 0.0
    %364 = vmatprep.subr.mxu0 0.0
    %365 = vmatpush2.xpose.msra.mxu0 0.0
    %366 = vmatprep.subr.mxu0 0.0
    %367 = vmatpush2.xpose.msra.mxu0 0.0
    %368 = vmatprep.subr.mxu0 0.0
    %369 = vmatpush2.xpose.msra.mxu0 0.0
    %370 = vmatprep.mubr.f32.mxu0 0.0
    %371 = vmatmul.mubr.f32.gmra.mxu0 %v302
    %v372 = vpop.f32.mrf.mxu0
    %v373 = vadd.f32 0.0, %v372
    %v374 = vpop.f32.mrf.mxu0
    %375 = vdwg.mxu0
    %376 = vrot.lane.b32.xlu0 %v212, 96
    %v377 = vpop.permute.xlu0 %376
    %v378 = vsel %vm225, %v212, 0
    %v380 = vsel %vm225, %v377, 0
    %382 = vmatprep.subr.mxu0 0.0
    %383 = vmatpush1.xpose.msra.mxu0 0.0
    %384 = vmatprep.subr.mxu0 0.0
    %385 = vmatpush1.xpose.msra.mxu0 0.0
    %386 = vmatprep.subr.mxu0 0.0
    %387 = vmatpush1.xpose.msra.mxu0 0.0
    %388 = vmatprep.subr.mxu0 0.0
    %389 = vmatpush1.xpose.msra.mxu0 0.0
    %390 = vmatprep.subr.mxu0 0.0
    %391 = vmatpush1.xpose.msra.mxu0 0.0
    %392 = vmatprep.subr.mxu0 0.0
    %393 = vmatpush1.xpose.msra.mxu0 0.0
    %394 = vmatprep.subr.mxu0 0.0
    %395 = vmatpush1.xpose.msra.mxu0 0.0
    %396 = vmatprep.subr.mxu0 0.0
    %397 = vmatpush1.xpose.msra.mxu0 0.0
    %398 = vmatprep.subr.mxu0 0.0
    %399 = vmatpush1.xpose.msra.mxu0 0.0
    %400 = vmatprep.subr.mxu0 0.0
    %401 = vmatpush1.xpose.msra.mxu0 0.0
    %402 = vmatprep.subr.mxu0 0.0
    %403 = vmatpush1.xpose.msra.mxu0 0.0
    %404 = vmatprep.subr.mxu0 0.0
    %405 = vmatpush1.xpose.msra.mxu0 0.0
    %406 = vmatprep.subr.mxu0 0.0
    %407 = vmatpush1.xpose.msra.mxu0 0.0
    %408 = vmatprep.subr.mxu0 0.0
    %409 = vmatpush1.xpose.msra.mxu0 0.0
    %410 = vmatprep.subr.mxu0 0.0
    %411 = vmatpush1.xpose.msra.mxu0 0.0
    %412 = vmatprep.subr.mxu0 0.0
    %413 = vmatpush1.xpose.msra.mxu0 %v380
    %414 = vmatprep.subr.mxu0 0.0
    %415 = vmatpush2.xpose.msra.mxu0 0.0
    %416 = vmatprep.subr.mxu0 0.0
    %417 = vmatpush2.xpose.msra.mxu0 0.0
    %418 = vmatprep.subr.mxu0 0.0
    %419 = vmatpush2.xpose.msra.mxu0 0.0
    %420 = vmatprep.subr.mxu0 0.0
    %421 = vmatpush2.xpose.msra.mxu0 0.0
    %422 = vmatprep.subr.mxu0 0.0
    %423 = vmatpush2.xpose.msra.mxu0 0.0
    %424 = vmatprep.subr.mxu0 0.0
    %425 = vmatpush2.xpose.msra.mxu0 0.0
    %426 = vmatprep.subr.mxu0 0.0
    %427 = vmatpush2.xpose.msra.mxu0 0.0
    %428 = vmatprep.subr.mxu0 0.0
    %429 = vmatpush2.xpose.msra.mxu0 0.0
    %430 = vmatprep.subr.mxu0 0.0
    %431 = vmatpush2.xpose.msra.mxu0 0.0
    %432 = vmatprep.subr.mxu0 0.0
    %433 = vmatpush2.xpose.msra.mxu0 0.0
    %434 = vmatprep.subr.mxu0 0.0
    %435 = vmatpush2.xpose.msra.mxu0 0.0
    %436 = vmatprep.subr.mxu0 0.0
    %437 = vmatpush2.xpose.msra.mxu0 0.0
    %438 = vmatprep.subr.mxu0 0.0
    %439 = vmatpush2.xpose.msra.mxu0 0.0
    %440 = vmatprep.subr.mxu0 0.0
    %441 = vmatpush2.xpose.msra.mxu0 0.0
    %442 = vmatprep.subr.mxu0 0.0
    %443 = vmatpush2.xpose.msra.mxu0 0.0
    %444 = vmatprep.subr.mxu0 0.0
    %445 = vmatpush2.xpose.msra.mxu0 0.0
    %446 = vmatprep.mubr.f32.mxu0 0.0
    %447 = vmatmul.mubr.f32.gmra.mxu0 %v378
    %v448 = vpop.f32.mrf.mxu0
    %v449 = vadd.f32 0.0, %v448
    %v450 = vpop.f32.mrf.mxu0
    %451 = vdwg.mxu0
    %452 = vrot.lane.b32.xlu0 %v214, 96
    %v453 = vpop.permute.xlu0 %452
    %v454 = vsel %vm225, %v214, 0
    %v456 = vsel %vm225, %v453, 0
    %458 = vmatprep.subr.mxu0 0.0
    %459 = vmatpush1.xpose.msra.mxu0 0.0
    %460 = vmatprep.subr.mxu0 0.0
    %461 = vmatpush1.xpose.msra.mxu0 0.0
    %462 = vmatprep.subr.mxu0 0.0
    %463 = vmatpush1.xpose.msra.mxu0 0.0
    %464 = vmatprep.subr.mxu0 0.0
    %465 = vmatpush1.xpose.msra.mxu0 0.0
    %466 = vmatprep.subr.mxu0 0.0
    %467 = vmatpush1.xpose.msra.mxu0 0.0
    %468 = vmatprep.subr.mxu0 0.0
    %469 = vmatpush1.xpose.msra.mxu0 0.0
    %470 = vmatprep.subr.mxu0 0.0
    %471 = vmatpush1.xpose.msra.mxu0 0.0
    %472 = vmatprep.subr.mxu0 0.0
    %473 = vmatpush1.xpose.msra.mxu0 0.0
    %474 = vmatprep.subr.mxu0 0.0
    %475 = vmatpush1.xpose.msra.mxu0 0.0
    %476 = vmatprep.subr.mxu0 0.0
    %477 = vmatpush1.xpose.msra.mxu0 0.0
    %478 = vmatprep.subr.mxu0 0.0
    %479 = vmatpush1.xpose.msra.mxu0 0.0
    %480 = vmatprep.subr.mxu0 0.0
    %481 = vmatpush1.xpose.msra.mxu0 0.0
    %482 = vmatprep.subr.mxu0 0.0
    %483 = vmatpush1.xpose.msra.mxu0 0.0
    %484 = vmatprep.subr.mxu0 0.0
    %485 = vmatpush1.xpose.msra.mxu0 0.0
    %486 = vmatprep.subr.mxu0 0.0
    %487 = vmatpush1.xpose.msra.mxu0 0.0
    %488 = vmatprep.subr.mxu0 0.0
    %489 = vmatpush1.xpose.msra.mxu0 %v456
    %490 = vmatprep.subr.mxu0 0.0
    %491 = vmatpush2.xpose.msra.mxu0 0.0
    %492 = vmatprep.subr.mxu0 0.0
    %493 = vmatpush2.xpose.msra.mxu0 0.0
    %494 = vmatprep.subr.mxu0 0.0
    %495 = vmatpush2.xpose.msra.mxu0 0.0
    %496 = vmatprep.subr.mxu0 0.0
    %497 = vmatpush2.xpose.msra.mxu0 0.0
    %498 = vmatprep.subr.mxu0 0.0
    %499 = vmatpush2.xpose.msra.mxu0 0.0
    %500 = vmatprep.subr.mxu0 0.0
    %501 = vmatpush2.xpose.msra.mxu0 0.0
    %502 = vmatprep.subr.mxu0 0.0
    %503 = vmatpush2.xpose.msra.mxu0 0.0
    %504 = vmatprep.subr.mxu0 0.0
    %505 = vmatpush2.xpose.msra.mxu0 0.0
    %506 = vmatprep.subr.mxu0 0.0
    %507 = vmatpush2.xpose.msra.mxu0 0.0
    %508 = vmatprep.subr.mxu0 0.0
    %509 = vmatpush2.xpose.msra.mxu0 0.0
    %510 = vmatprep.subr.mxu0 0.0
    %511 = vmatpush2.xpose.msra.mxu0 0.0
    %512 = vmatprep.subr.mxu0 0.0
    %513 = vmatpush2.xpose.msra.mxu0 0.0
    %514 = vmatprep.subr.mxu0 0.0
    %515 = vmatpush2.xpose.msra.mxu0 0.0
    %516 = vmatprep.subr.mxu0 0.0
    %517 = vmatpush2.xpose.msra.mxu0 0.0
    %518 = vmatprep.subr.mxu0 0.0
    %519 = vmatpush2.xpose.msra.mxu0 0.0
    %520 = vmatprep.subr.mxu0 0.0
    %521 = vmatpush2.xpose.msra.mxu0 0.0
    %522 = vmatprep.mubr.f32.mxu0 0.0
    %523 = vmatmul.mubr.f32.gmra.mxu0 %v454
    %v524 = vpop.f32.mrf.mxu0
    %v525 = vadd.f32 0.0, %v524
    %v526 = vpop.f32.mrf.mxu0
    %527 = vdwg.mxu0
    %528 = vrot.lane.b32.xlu0 %v216, 96
    %v529 = vpop.permute.xlu0 %528
    %v530 = vsel %vm225, %v216, 0
    %v532 = vsel %vm225, %v529, 0
    %534 = vmatprep.subr.mxu0 0.0
    %535 = vmatpush1.xpose.msra.mxu0 0.0
    %536 = vmatprep.subr.mxu0 0.0
    %537 = vmatpush1.xpose.msra.mxu0 0.0
    %538 = vmatprep.subr.mxu0 0.0
    %539 = vmatpush1.xpose.msra.mxu0 0.0
    %540 = vmatprep.subr.mxu0 0.0
    %541 = vmatpush1.xpose.msra.mxu0 0.0
    %542 = vmatprep.subr.mxu0 0.0
    %543 = vmatpush1.xpose.msra.mxu0 0.0
    %544 = vmatprep.subr.mxu0 0.0
    %545 = vmatpush1.xpose.msra.mxu0 0.0
    %546 = vmatprep.subr.mxu0 0.0
    %547 = vmatpush1.xpose.msra.mxu0 0.0
    %548 = vmatprep.subr.mxu0 0.0
    %549 = vmatpush1.xpose.msra.mxu0 0.0
    %550 = vmatprep.subr.mxu0 0.0
    %551 = vmatpush1.xpose.msra.mxu0 0.0
    %552 = vmatprep.subr.mxu0 0.0
    %553 = vmatpush1.xpose.msra.mxu0 0.0
    %554 = vmatprep.subr.mxu0 0.0
    %555 = vmatpush1.xpose.msra.mxu0 0.0
    %556 = vmatprep.subr.mxu0 0.0
    %557 = vmatpush1.xpose.msra.mxu0 0.0
    %558 = vmatprep.subr.mxu0 0.0
    %559 = vmatpush1.xpose.msra.mxu0 0.0
    %560 = vmatprep.subr.mxu0 0.0
    %561 = vmatpush1.xpose.msra.mxu0 0.0
    %562 = vmatprep.subr.mxu0 0.0
    %563 = vmatpush1.xpose.msra.mxu0 0.0
    %564 = vmatprep.subr.mxu0 0.0
    %565 = vmatpush1.xpose.msra.mxu0 %v532
    %566 = vmatprep.subr.mxu0 0.0
    %567 = vmatpush2.xpose.msra.mxu0 0.0
    %568 = vmatprep.subr.mxu0 0.0
    %569 = vmatpush2.xpose.msra.mxu0 0.0
    %570 = vmatprep.subr.mxu0 0.0
    %571 = vmatpush2.xpose.msra.mxu0 0.0
    %572 = vmatprep.subr.mxu0 0.0
    %573 = vmatpush2.xpose.msra.mxu0 0.0
    %574 = vmatprep.subr.mxu0 0.0
    %575 = vmatpush2.xpose.msra.mxu0 0.0
    %576 = vmatprep.subr.mxu0 0.0
    %577 = vmatpush2.xpose.msra.mxu0 0.0
    %578 = vmatprep.subr.mxu0 0.0
    %579 = vmatpush2.xpose.msra.mxu0 0.0
    %580 = vmatprep.subr.mxu0 0.0
    %581 = vmatpush2.xpose.msra.mxu0 0.0
    %582 = vmatprep.subr.mxu0 0.0
    %583 = vmatpush2.xpose.msra.mxu0 0.0
    %584 = vmatprep.subr.mxu0 0.0
    %585 = vmatpush2.xpose.msra.mxu0 0.0
    %586 = vmatprep.subr.mxu0 0.0
    %587 = vmatpush2.xpose.msra.mxu0 0.0
    %588 = vmatprep.subr.mxu0 0.0
    %589 = vmatpush2.xpose.msra.mxu0 0.0
    %590 = vmatprep.subr.mxu0 0.0
    %591 = vmatpush2.xpose.msra.mxu0 0.0
    %592 = vmatprep.subr.mxu0 0.0
    %593 = vmatpush2.xpose.msra.mxu0 0.0
    %594 = vmatprep.subr.mxu0 0.0
    %595 = vmatpush2.xpose.msra.mxu0 0.0
    %596 = vmatprep.subr.mxu0 0.0
    %597 = vmatpush2.xpose.msra.mxu0 0.0
    %598 = vmatprep.mubr.f32.mxu0 0.0
    %599 = vmatmul.mubr.f32.gmra.mxu0 %v530
    %v600 = vpop.f32.mrf.mxu0
    %v601 = vadd.f32 0.0, %v600
    %v602 = vpop.f32.mrf.mxu0
    %603 = vdwg.mxu0
    %604 = vrot.lane.b32.xlu0 %v218, 96
    %v605 = vpop.permute.xlu0 %604
    %v606 = vsel %vm225, %v218, 0
    %v608 = vsel %vm225, %v605, 0
    %610 = vmatprep.subr.mxu0 0.0
    %611 = vmatpush1.xpose.msra.mxu0 0.0
    %612 = vmatprep.subr.mxu0 0.0
    %613 = vmatpush1.xpose.msra.mxu0 0.0
    %614 = vmatprep.subr.mxu0 0.0
    %615 = vmatpush1.xpose.msra.mxu0 0.0
    %616 = vmatprep.subr.mxu0 0.0
    %617 = vmatpush1.xpose.msra.mxu0 0.0
    %618 = vmatprep.subr.mxu0 0.0
    %619 = vmatpush1.xpose.msra.mxu0 0.0
    %620 = vmatprep.subr.mxu0 0.0
    %621 = vmatpush1.xpose.msra.mxu0 0.0
    %622 = vmatprep.subr.mxu0 0.0
    %623 = vmatpush1.xpose.msra.mxu0 0.0
    %624 = vmatprep.subr.mxu0 0.0
    %625 = vmatpush1.xpose.msra.mxu0 0.0
    %626 = vmatprep.subr.mxu0 0.0
    %627 = vmatpush1.xpose.msra.mxu0 0.0
    %628 = vmatprep.subr.mxu0 0.0
    %629 = vmatpush1.xpose.msra.mxu0 0.0
    %630 = vmatprep.subr.mxu0 0.0
    %631 = vmatpush1.xpose.msra.mxu0 0.0
    %632 = vmatprep.subr.mxu0 0.0
    %633 = vmatpush1.xpose.msra.mxu0 0.0
    %634 = vmatprep.subr.mxu0 0.0
    %635 = vmatpush1.xpose.msra.mxu0 0.0
    %636 = vmatprep.subr.mxu0 0.0
    %637 = vmatpush1.xpose.msra.mxu0 0.0
    %638 = vmatprep.subr.mxu0 0.0
    %639 = vmatpush1.xpose.msra.mxu0 0.0
    %640 = vmatprep.subr.mxu0 0.0
    %641 = vmatpush1.xpose.msra.mxu0 %v608
    %642 = vmatprep.subr.mxu0 0.0
    %643 = vmatpush2.xpose.msra.mxu0 0.0
    %644 = vmatprep.subr.mxu0 0.0
    %645 = vmatpush2.xpose.msra.mxu0 0.0
    %646 = vmatprep.subr.mxu0 0.0
    %647 = vmatpush2.xpose.msra.mxu0 0.0
    %648 = vmatprep.subr.mxu0 0.0
    %649 = vmatpush2.xpose.msra.mxu0 0.0
    %650 = vmatprep.subr.mxu0 0.0
    %651 = vmatpush2.xpose.msra.mxu0 0.0
    %652 = vmatprep.subr.mxu0 0.0
    %653 = vmatpush2.xpose.msra.mxu0 0.0
    %654 = vmatprep.subr.mxu0 0.0
    %655 = vmatpush2.xpose.msra.mxu0 0.0
    %656 = vmatprep.subr.mxu0 0.0
    %657 = vmatpush2.xpose.msra.mxu0 0.0
    %658 = vmatprep.subr.mxu0 0.0
    %659 = vmatpush2.xpose.msra.mxu0 0.0
    %660 = vmatprep.subr.mxu0 0.0
    %661 = vmatpush2.xpose.msra.mxu0 0.0
    %662 = vmatprep.subr.mxu0 0.0
    %663 = vmatpush2.xpose.msra.mxu0 0.0
    %664 = vmatprep.subr.mxu0 0.0
    %665 = vmatpush2.xpose.msra.mxu0 0.0
    %666 = vmatprep.subr.mxu0 0.0
    %667 = vmatpush2.xpose.msra.mxu0 0.0
    %668 = vmatprep.subr.mxu0 0.0
    %669 = vmatpush2.xpose.msra.mxu0 0.0
    %670 = vmatprep.subr.mxu0 0.0
    %671 = vmatpush2.xpose.msra.mxu0 0.0
    %672 = vmatprep.subr.mxu0 0.0
    %673 = vmatpush2.xpose.msra.mxu0 0.0
    %674 = vmatprep.mubr.f32.mxu0 0.0
    %675 = vmatmul.mubr.f32.gmra.mxu0 %v606
    %v676 = vpop.f32.mrf.mxu0
    %v677 = vadd.f32 0.0, %v676
    %v678 = vpop.f32.mrf.mxu0
    %679 = vdwg.mxu0
    %680 = vrot.lane.b32.xlu0 %v220, 96
    %v681 = vpop.permute.xlu0 %680
    %v682 = vsel %vm225, %v220, 0
    %v684 = vsel %vm225, %v681, 0
    %686 = vmatprep.subr.mxu0 0.0
    %687 = vmatpush1.xpose.msra.mxu0 0.0
    %688 = vmatprep.subr.mxu0 0.0
    %689 = vmatpush1.xpose.msra.mxu0 0.0
    %690 = vmatprep.subr.mxu0 0.0
    %691 = vmatpush1.xpose.msra.mxu0 0.0
    %692 = vmatprep.subr.mxu0 0.0
    %693 = vmatpush1.xpose.msra.mxu0 0.0
    %694 = vmatprep.subr.mxu0 0.0
    %695 = vmatpush1.xpose.msra.mxu0 0.0
    %696 = vmatprep.subr.mxu0 0.0
    %697 = vmatpush1.xpose.msra.mxu0 0.0
    %698 = vmatprep.subr.mxu0 0.0
    %699 = vmatpush1.xpose.msra.mxu0 0.0
    %700 = vmatprep.subr.mxu0 0.0
    %701 = vmatpush1.xpose.msra.mxu0 0.0
    %702 = vmatprep.subr.mxu0 0.0
    %703 = vmatpush1.xpose.msra.mxu0 0.0
    %704 = vmatprep.subr.mxu0 0.0
    %705 = vmatpush1.xpose.msra.mxu0 0.0
    %706 = vmatprep.subr.mxu0 0.0
    %707 = vmatpush1.xpose.msra.mxu0 0.0
    %708 = vmatprep.subr.mxu0 0.0
    %709 = vmatpush1.xpose.msra.mxu0 0.0
    %710 = vmatprep.subr.mxu0 0.0
    %711 = vmatpush1.xpose.msra.mxu0 0.0
    %712 = vmatprep.subr.mxu0 0.0
    %713 = vmatpush1.xpose.msra.mxu0 0.0
    %714 = vmatprep.subr.mxu0 0.0
    %715 = vmatpush1.xpose.msra.mxu0 0.0
    %716 = vmatprep.subr.mxu0 0.0
    %717 = vmatpush1.xpose.msra.mxu0 %v684
    %718 = vmatprep.subr.mxu0 0.0
    %719 = vmatpush2.xpose.msra.mxu0 0.0
    %720 = vmatprep.subr.mxu0 0.0
    %721 = vmatpush2.xpose.msra.mxu0 0.0
    %722 = vmatprep.subr.mxu0 0.0
    %723 = vmatpush2.xpose.msra.mxu0 0.0
    %724 = vmatprep.subr.mxu0 0.0
    %725 = vmatpush2.xpose.msra.mxu0 0.0
    %726 = vmatprep.subr.mxu0 0.0
    %727 = vmatpush2.xpose.msra.mxu0 0.0
    %728 = vmatprep.subr.mxu0 0.0
    %729 = vmatpush2.xpose.msra.mxu0 0.0
    %730 = vmatprep.subr.mxu0 0.0
    %731 = vmatpush2.xpose.msra.mxu0 0.0
    %732 = vmatprep.subr.mxu0 0.0
    %733 = vmatpush2.xpose.msra.mxu0 0.0
    %734 = vmatprep.subr.mxu0 0.0
    %735 = vmatpush2.xpose.msra.mxu0 0.0
    %736 = vmatprep.subr.mxu0 0.0
    %737 = vmatpush2.xpose.msra.mxu0 0.0
    %738 = vmatprep.subr.mxu0 0.0
    %739 = vmatpush2.xpose.msra.mxu0 0.0
    %740 = vmatprep.subr.mxu0 0.0
    %741 = vmatpush2.xpose.msra.mxu0 0.0
    %742 = vmatprep.subr.mxu0 0.0
    %743 = vmatpush2.xpose.msra.mxu0 0.0
    %744 = vmatprep.subr.mxu0 0.0
    %745 = vmatpush2.xpose.msra.mxu0 0.0
    %746 = vmatprep.subr.mxu0 0.0
    %747 = vmatpush2.xpose.msra.mxu0 0.0
    %748 = vmatprep.subr.mxu0 0.0
    %749 = vmatpush2.xpose.msra.mxu0 0.0
    %750 = vmatprep.mubr.f32.mxu0 0.0
    %751 = vmatmul.mubr.f32.gmra.mxu0 %v682
    %v752 = vpop.f32.mrf.mxu0
    %v753 = vadd.f32 0.0, %v752
    %v754 = vpop.f32.mrf.mxu0
    %755 = vdwg.mxu0
    %756 = vrot.lane.b32.xlu0 %v222, 96
    %v757 = vpop.permute.xlu0 %756
    %v758 = vsel %vm225, %v222, 0
    %v760 = vsel %vm225, %v757, 0
    %762 = vmatprep.subr.mxu0 0.0
    %763 = vmatpush1.xpose.msra.mxu0 0.0
    %764 = vmatprep.subr.mxu0 0.0
    %765 = vmatpush1.xpose.msra.mxu0 0.0
    %766 = vmatprep.subr.mxu0 0.0
    %767 = vmatpush1.xpose.msra.mxu0 0.0
    %768 = vmatprep.subr.mxu0 0.0
    %769 = vmatpush1.xpose.msra.mxu0 0.0
    %770 = vmatprep.subr.mxu0 0.0
    %771 = vmatpush1.xpose.msra.mxu0 0.0
    %772 = vmatprep.subr.mxu0 0.0
    %773 = vmatpush1.xpose.msra.mxu0 0.0
    %774 = vmatprep.subr.mxu0 0.0
    %775 = vmatpush1.xpose.msra.mxu0 0.0
    %776 = vmatprep.subr.mxu0 0.0
    %777 = vmatpush1.xpose.msra.mxu0 0.0
    %778 = vmatprep.subr.mxu0 0.0
    %779 = vmatpush1.xpose.msra.mxu0 0.0
    %780 = vmatprep.subr.mxu0 0.0
    %781 = vmatpush1.xpose.msra.mxu0 0.0
    %782 = vmatprep.subr.mxu0 0.0
    %783 = vmatpush1.xpose.msra.mxu0 0.0
    %784 = vmatprep.subr.mxu0 0.0
    %785 = vmatpush1.xpose.msra.mxu0 0.0
    %786 = vmatprep.subr.mxu0 0.0
    %787 = vmatpush1.xpose.msra.mxu0 0.0
    %788 = vmatprep.subr.mxu0 0.0
    %789 = vmatpush1.xpose.msra.mxu0 0.0
    %790 = vmatprep.subr.mxu0 0.0
    %791 = vmatpush1.xpose.msra.mxu0 0.0
    %792 = vmatprep.subr.mxu0 0.0
    %793 = vmatpush1.xpose.msra.mxu0 %v760
    %794 = vmatprep.subr.mxu0 0.0
    %795 = vmatpush2.xpose.msra.mxu0 0.0
    %796 = vmatprep.subr.mxu0 0.0
    %797 = vmatpush2.xpose.msra.mxu0 0.0
    %798 = vmatprep.subr.mxu0 0.0
    %799 = vmatpush2.xpose.msra.mxu0 0.0
    %800 = vmatprep.subr.mxu0 0.0
    %801 = vmatpush2.xpose.msra.mxu0 0.0
    %802 = vmatprep.subr.mxu0 0.0
    %803 = vmatpush2.xpose.msra.mxu0 0.0
    %804 = vmatprep.subr.mxu0 0.0
    %805 = vmatpush2.xpose.msra.mxu0 0.0
    %806 = vmatprep.subr.mxu0 0.0
    %807 = vmatpush2.xpose.msra.mxu0 0.0
    %808 = vmatprep.subr.mxu0 0.0
    %809 = vmatpush2.xpose.msra.mxu0 0.0
    %810 = vmatprep.subr.mxu0 0.0
    %811 = vmatpush2.xpose.msra.mxu0 0.0
    %812 = vmatprep.subr.mxu0 0.0
    %813 = vmatpush2.xpose.msra.mxu0 0.0
    %814 = vmatprep.subr.mxu0 0.0
    %815 = vmatpush2.xpose.msra.mxu0 0.0
    %816 = vmatprep.subr.mxu0 0.0
    %817 = vmatpush2.xpose.msra.mxu0 0.0
    %818 = vmatprep.subr.mxu0 0.0
    %819 = vmatpush2.xpose.msra.mxu0 0.0
    %820 = vmatprep.subr.mxu0 0.0
    %821 = vmatpush2.xpose.msra.mxu0 0.0
    %822 = vmatprep.subr.mxu0 0.0
    %823 = vmatpush2.xpose.msra.mxu0 0.0
    %824 = vmatprep.subr.mxu0 0.0
    %825 = vmatpush2.xpose.msra.mxu0 0.0
    %826 = vmatprep.mubr.f32.mxu0 0.0
    %827 = vmatmul.mubr.f32.gmra.mxu0 %v758
    %v828 = vpop.f32.mrf.mxu0
    %v829 = vadd.f32 0.0, %v828
    %v830 = vpop.f32.mrf.mxu0
    %831 = vdwg.mxu0
    %v832 = vsel %vm225, %v297, -inf
    %833 = vmax.xlane.f32.xlu0 %v832
    %v834 = vpop.xlane.xlu0 %833
    %v835 = vsel %vm225, %v373, -inf
    %836 = vmax.xlane.f32.xlu0 %v835
    %v837 = vpop.xlane.xlu0 %836
    %v838 = vsel %vm225, %v449, -inf
    %839 = vmax.xlane.f32.xlu0 %v838
    %v840 = vpop.xlane.xlu0 %839
    %v841 = vsel %vm225, %v525, -inf
    %842 = vmax.xlane.f32.xlu0 %v841
    %v843 = vpop.xlane.xlu0 %842
    %v844 = vsel %vm225, %v601, -inf
    %845 = vmax.xlane.f32.xlu0 %v844
    %v846 = vpop.xlane.xlu0 %845
    %v847 = vsel %vm225, %v677, -inf
    %848 = vmax.xlane.f32.xlu0 %v847
    %v849 = vpop.xlane.xlu0 %848
    %v850 = vsel %vm225, %v753, -inf
    %851 = vmax.xlane.f32.xlu0 %v850
    %v852 = vpop.xlane.xlu0 %851
    %v853 = vsel %vm225, %v829, -inf
    %854 = vmax.xlane.f32.xlu0 %v853
    %v855 = vpop.xlane.xlu0 %854
    %v856 = vsub.f32 %v297, %v834
    %v857 = vsub.f32 %v373, %v837
    %v858 = vsub.f32 %v449, %v840
    %v859 = vsub.f32 %v525, %v843
    %v860 = vsub.f32 %v601, %v846
    %v861 = vsub.f32 %v677, %v849
    %v862 = vsub.f32 %v753, %v852
    %v863 = vsub.f32 %v829, %v855
    %v864 = vmul.f32 %v856, 1.442695
    %v865 = vpow.pop %v864
    %v866 = vmul.f32 %v857, 1.442695
    %v867 = vpow.pop %v866
    %v868 = vmul.f32 %v858, 1.442695
    %v869 = vpow.pop %v868
    %v870 = vmul.f32 %v859, 1.442695
    %v871 = vpow.pop %v870
    %v872 = vmul.f32 %v860, 1.442695
    %v873 = vpow.pop %v872
    %v874 = vmul.f32 %v861, 1.442695
    %v875 = vpow.pop %v874
    %v876 = vmul.f32 %v862, 1.442695
    %v877 = vpow.pop %v876
    %v878 = vmul.f32 %v863, 1.442695
    %v879 = vpow.pop %v878
    %v880 = vsel %vm225, %v865, 0.0
    %881 = vadd.xlane.f32.xlu0 %v880
    %v882 = vpop.xlane.xlu0 %881
    %v883 = vsel %vm225, %v867, 0.0
    %884 = vadd.xlane.f32.xlu0 %v883
    %v885 = vpop.xlane.xlu0 %884
    %v886 = vsel %vm225, %v869, 0.0
    %887 = vadd.xlane.f32.xlu0 %v886
    %v888 = vpop.xlane.xlu0 %887
    %v889 = vsel %vm225, %v871, 0.0
    %890 = vadd.xlane.f32.xlu0 %v889
    %v891 = vpop.xlane.xlu0 %890
    %v892 = vsel %vm225, %v873, 0.0
    %893 = vadd.xlane.f32.xlu0 %v892
    %v894 = vpop.xlane.xlu0 %893
    %v895 = vsel %vm225, %v875, 0.0
    %896 = vadd.xlane.f32.xlu0 %v895
    %v897 = vpop.xlane.xlu0 %896
    %v898 = vsel %vm225, %v877, 0.0
    %899 = vadd.xlane.f32.xlu0 %v898
    %v900 = vpop.xlane.xlu0 %899
    %v901 = vsel %vm225, %v879, 0.0
    %902 = vadd.xlane.f32.xlu0 %v901
    %v903 = vpop.xlane.xlu0 %902
    %v904 = vrcp.pop %v882
    %v905 = vrcp.pop %v885
    %v906 = vrcp.pop %v888
    %v907 = vrcp.pop %v891
    %v908 = vrcp.pop %v894
    %v909 = vrcp.pop %v897
    %v910 = vrcp.pop %v900
    %v911 = vrcp.pop %v903
    %v912 = vmul.f32 %v865, %v904
    %v913 = vmul.f32 %v867, %v905
    %v914 = vmul.f32 %v869, %v906
    %v915 = vmul.f32 %v871, %v907
    %v916 = vmul.f32 %v873, %v908
    %v917 = vmul.f32 %v875, %v909
    %v918 = vmul.f32 %v877, %v910
    %v919 = vmul.f32 %v879, %v911
    %920 = vrot.lane.b32.xlu0 %v201, 64
    %v921 = vpop.permute.xlu0 %920
    %v924 = vsel %vm225, %v912, 0
    %926 = vmatprep.subr.mxu0 0.0
    %927 = vmatpush1.msra.mxu0 0.0
    %928 = vmatprep.subr.mxu0 0.0
    %929 = vmatpush1.msra.mxu0 0.0
    %930 = vmatprep.subr.mxu0 0.0
    %931 = vmatpush1.msra.mxu0 0.0
    %932 = vmatprep.subr.mxu0 0.0
    %933 = vmatpush1.msra.mxu0 0.0
    %934 = vmatprep.subr.mxu0 0.0
    %935 = vmatpush1.msra.mxu0 0.0
    %936 = vmatprep.subr.mxu0 0.0
    %937 = vmatpush1.msra.mxu0 0.0
    %938 = vmatprep.subr.mxu0 0.0
    %939 = vmatpush1.msra.mxu0 0.0
    %940 = vmatprep.subr.mxu0 0.0
    %941 = vmatpush1.msra.mxu0 0.0
    %942 = vmatprep.subr.mxu0 0.0
    %943 = vmatpush1.msra.mxu0 0.0
    %944 = vmatprep.subr.mxu0 0.0
    %945 = vmatpush1.msra.mxu0 0.0
    %946 = vmatprep.subr.mxu0 0.0
    %947 = vmatpush1.msra.mxu0 0.0
    %948 = vmatprep.subr.mxu0 0.0
    %949 = vmatpush1.msra.mxu0 0.0
    %950 = vmatprep.subr.mxu0 0.0
    %951 = vmatpush1.msra.mxu0 0.0
    %952 = vmatprep.subr.mxu0 0.0
    %953 = vmatpush1.msra.mxu0 0.0
    %954 = vmatprep.subr.mxu0 0.0
    %955 = vmatpush1.msra.mxu0 0.0
    %956 = vmatprep.subr.mxu0 0.0
    %957 = vmatpush1.msra.mxu0 %v921
    %958 = vmatprep.subr.mxu0 0.0
    %959 = vmatpush2.msra.mxu0 0.0
    %960 = vmatprep.subr.mxu0 0.0
    %961 = vmatpush2.msra.mxu0 0.0
    %962 = vmatprep.subr.mxu0 0.0
    %963 = vmatpush2.msra.mxu0 0.0
    %964 = vmatprep.subr.mxu0 0.0
    %965 = vmatpush2.msra.mxu0 0.0
    %966 = vmatprep.subr.mxu0 0.0
    %967 = vmatpush2.msra.mxu0 0.0
    %968 = vmatprep.subr.mxu0 0.0
    %969 = vmatpush2.msra.mxu0 0.0
    %970 = vmatprep.subr.mxu0 0.0
    %971 = vmatpush2.msra.mxu0 0.0
    %972 = vmatprep.subr.mxu0 0.0
    %973 = vmatpush2.msra.mxu0 0.0
    %974 = vmatprep.subr.mxu0 0.0
    %975 = vmatpush2.msra.mxu0 0.0
    %976 = vmatprep.subr.mxu0 0.0
    %977 = vmatpush2.msra.mxu0 0.0
    %978 = vmatprep.subr.mxu0 0.0
    %979 = vmatpush2.msra.mxu0 0.0
    %980 = vmatprep.subr.mxu0 0.0
    %981 = vmatpush2.msra.mxu0 0.0
    %982 = vmatprep.subr.mxu0 0.0
    %983 = vmatpush2.msra.mxu0 0.0
    %984 = vmatprep.subr.mxu0 0.0
    %985 = vmatpush2.msra.mxu0 0.0
    %986 = vmatprep.subr.mxu0 0.0
    %987 = vmatpush2.msra.mxu0 0.0
    %988 = vmatprep.subr.mxu0 0.0
    %989 = vmatpush2.msra.mxu0 0.0
    %990 = vmatprep.mubr.f32.mxu0 0.0
    %991 = vmatmul.mubr.f32.gmra.mxu0 %v924
    %v992 = vpop.f32.mrf.mxu0
    %v993 = vadd.f32 0.0, %v992
    %v994 = vpop.f32.mrf.mxu0
    %995 = vdwg.mxu0
    %996 = vrot.lane.b32.xlu0 %v206, 64
    %v997 = vpop.permute.xlu0 %996
    %v1000 = vsel %vm225, %v913, 0
    %1002 = vmatprep.subr.mxu0 0.0
    %1003 = vmatpush1.msra.mxu0 0.0
    %1004 = vmatprep.subr.mxu0 0.0
    %1005 = vmatpush1.msra.mxu0 0.0
    %1006 = vmatprep.subr.mxu0 0.0
    %1007 = vmatpush1.msra.mxu0 0.0
    %1008 = vmatprep.subr.mxu0 0.0
    %1009 = vmatpush1.msra.mxu0 0.0
    %1010 = vmatprep.subr.mxu0 0.0
    %1011 = vmatpush1.msra.mxu0 0.0
    %1012 = vmatprep.subr.mxu0 0.0
    %1013 = vmatpush1.msra.mxu0 0.0
    %1014 = vmatprep.subr.mxu0 0.0
    %1015 = vmatpush1.msra.mxu0 0.0
    %1016 = vmatprep.subr.mxu0 0.0
    %1017 = vmatpush1.msra.mxu0 0.0
    %1018 = vmatprep.subr.mxu0 0.0
    %1019 = vmatpush1.msra.mxu0 0.0
    %1020 = vmatprep.subr.mxu0 0.0
    %1021 = vmatpush1.msra.mxu0 0.0
    %1022 = vmatprep.subr.mxu0 0.0
    %1023 = vmatpush1.msra.mxu0 0.0
    %1024 = vmatprep.subr.mxu0 0.0
    %1025 = vmatpush1.msra.mxu0 0.0
    %1026 = vmatprep.subr.mxu0 0.0
    %1027 = vmatpush1.msra.mxu0 0.0
    %1028 = vmatprep.subr.mxu0 0.0
    %1029 = vmatpush1.msra.mxu0 0.0
    %1030 = vmatprep.subr.mxu0 0.0
    %1031 = vmatpush1.msra.mxu0 0.0
    %1032 = vmatprep.subr.mxu0 0.0
    %1033 = vmatpush1.msra.mxu0 %v997
    %1034 = vmatprep.subr.mxu0 0.0
    %1035 = vmatpush2.msra.mxu0 0.0
    %1036 = vmatprep.subr.mxu0 0.0
    %1037 = vmatpush2.msra.mxu0 0.0
    %1038 = vmatprep.subr.mxu0 0.0
    %1039 = vmatpush2.msra.mxu0 0.0
    %1040 = vmatprep.subr.mxu0 0.0
    %1041 = vmatpush2.msra.mxu0 0.0
    %1042 = vmatprep.subr.mxu0 0.0
    %1043 = vmatpush2.msra.mxu0 0.0
    %1044 = vmatprep.subr.mxu0 0.0
    %1045 = vmatpush2.msra.mxu0 0.0
    %1046 = vmatprep.subr.mxu0 0.0
    %1047 = vmatpush2.msra.mxu0 0.0
    %1048 = vmatprep.subr.mxu0 0.0
    %1049 = vmatpush2.msra.mxu0 0.0
    %1050 = vmatprep.subr.mxu0 0.0
    %1051 = vmatpush2.msra.mxu0 0.0
    %1052 = vmatprep.subr.mxu0 0.0
    %1053 = vmatpush2.msra.mxu0 0.0
    %1054 = vmatprep.subr.mxu0 0.0
    %1055 = vmatpush2.msra.mxu0 0.0
    %1056 = vmatprep.subr.mxu0 0.0
    %1057 = vmatpush2.msra.mxu0 0.0
    %1058 = vmatprep.subr.mxu0 0.0
    %1059 = vmatpush2.msra.mxu0 0.0
    %1060 = vmatprep.subr.mxu0 0.0
    %1061 = vmatpush2.msra.mxu0 0.0
    %1062 = vmatprep.subr.mxu0 0.0
    %1063 = vmatpush2.msra.mxu0 0.0
    %1064 = vmatprep.subr.mxu0 0.0
    %1065 = vmatpush2.msra.mxu0 0.0
    %1066 = vmatprep.mubr.f32.mxu0 0.0
    %1067 = vmatmul.mubr.f32.gmra.mxu0 %v1000
    %v1068 = vpop.f32.mrf.mxu0
    %v1069 = vadd.f32 0.0, %v1068
    %v1070 = vpop.f32.mrf.mxu0
    %1071 = vdwg.mxu0
    %1072 = vrot.lane.b32.xlu0 %v212, 64
    %v1073 = vpop.permute.xlu0 %1072
    %v1076 = vsel %vm225, %v914, 0
    %1078 = vmatprep.subr.mxu0 0.0
    %1079 = vmatpush1.msra.mxu0 0.0
    %1080 = vmatprep.subr.mxu0 0.0
    %1081 = vmatpush1.msra.mxu0 0.0
    %1082 = vmatprep.subr.mxu0 0.0
    %1083 = vmatpush1.msra.mxu0 0.0
    %1084 = vmatprep.subr.mxu0 0.0
    %1085 = vmatpush1.msra.mxu0 0.0
    %1086 = vmatprep.subr.mxu0 0.0
    %1087 = vmatpush1.msra.mxu0 0.0
    %1088 = vmatprep.subr.mxu0 0.0
    %1089 = vmatpush1.msra.mxu0 0.0
    %1090 = vmatprep.subr.mxu0 0.0
    %1091 = vmatpush1.msra.mxu0 0.0
    %1092 = vmatprep.subr.mxu0 0.0
    %1093 = vmatpush1.msra.mxu0 0.0
    %1094 = vmatprep.subr.mxu0 0.0
    %1095 = vmatpush1.msra.mxu0 0.0
    %1096 = vmatprep.subr.mxu0 0.0
    %1097 = vmatpush1.msra.mxu0 0.0
    %1098 = vmatprep.subr.mxu0 0.0
    %1099 = vmatpush1.msra.mxu0 0.0
    %1100 = vmatprep.subr.mxu0 0.0
    %1101 = vmatpush1.msra.mxu0 0.0
    %1102 = vmatprep.subr.mxu0 0.0
    %1103 = vmatpush1.msra.mxu0 0.0
    %1104 = vmatprep.subr.mxu0 0.0
    %1105 = vmatpush1.msra.mxu0 0.0
    %1106 = vmatprep.subr.mxu0 0.0
    %1107 = vmatpush1.msra.mxu0 0.0
    %1108 = vmatprep.subr.mxu0 0.0
    %1109 = vmatpush1.msra.mxu0 %v1073
    %1110 = vmatprep.subr.mxu0 0.0
    %1111 = vmatpush2.msra.mxu0 0.0
    %1112 = vmatprep.subr.mxu0 0.0
    %1113 = vmatpush2.msra.mxu0 0.0
    %1114 = vmatprep.subr.mxu0 0.0
    %1115 = vmatpush2.msra.mxu0 0.0
    %1116 = vmatprep.subr.mxu0 0.0
    %1117 = vmatpush2.msra.mxu0 0.0
    %1118 = vmatprep.subr.mxu0 0.0
    %1119 = vmatpush2.msra.mxu0 0.0
    %1120 = vmatprep.subr.mxu0 0.0
    %1121 = vmatpush2.msra.mxu0 0.0
    %1122 = vmatprep.subr.mxu0 0.0
    %1123 = vmatpush2.msra.mxu0 0.0
    %1124 = vmatprep.subr.mxu0 0.0
    %1125 = vmatpush2.msra.mxu0 0.0
    %1126 = vmatprep.subr.mxu0 0.0
    %1127 = vmatpush2.msra.mxu0 0.0
    %1128 = vmatprep.subr.mxu0 0.0
    %1129 = vmatpush2.msra.mxu0 0.0
    %1130 = vmatprep.subr.mxu0 0.0
    %1131 = vmatpush2.msra.mxu0 0.0
    %1132 = vmatprep.subr.mxu0 0.0
    %1133 = vmatpush2.msra.mxu0 0.0
    %1134 = vmatprep.subr.mxu0 0.0
    %1135 = vmatpush2.msra.mxu0 0.0
    %1136 = vmatprep.subr.mxu0 0.0
    %1137 = vmatpush2.msra.mxu0 0.0
    %1138 = vmatprep.subr.mxu0 0.0
    %1139 = vmatpush2.msra.mxu0 0.0
    %1140 = vmatprep.subr.mxu0 0.0
    %1141 = vmatpush2.msra.mxu0 0.0
    %1142 = vmatprep.mubr.f32.mxu0 0.0
    %1143 = vmatmul.mubr.f32.gmra.mxu0 %v1076
    %v1144 = vpop.f32.mrf.mxu0
    %v1145 = vadd.f32 0.0, %v1144
    %v1146 = vpop.f32.mrf.mxu0
    %1147 = vdwg.mxu0
    %1148 = vrot.lane.b32.xlu0 %v214, 64
    %v1149 = vpop.permute.xlu0 %1148
    %v1152 = vsel %vm225, %v915, 0
    %1154 = vmatprep.subr.mxu0 0.0
    %1155 = vmatpush1.msra.mxu0 0.0
    %1156 = vmatprep.subr.mxu0 0.0
    %1157 = vmatpush1.msra.mxu0 0.0
    %1158 = vmatprep.subr.mxu0 0.0
    %1159 = vmatpush1.msra.mxu0 0.0
    %1160 = vmatprep.subr.mxu0 0.0
    %1161 = vmatpush1.msra.mxu0 0.0
    %1162 = vmatprep.subr.mxu0 0.0
    %1163 = vmatpush1.msra.mxu0 0.0
    %1164 = vmatprep.subr.mxu0 0.0
    %1165 = vmatpush1.msra.mxu0 0.0
    %1166 = vmatprep.subr.mxu0 0.0
    %1167 = vmatpush1.msra.mxu0 0.0
    %1168 = vmatprep.subr.mxu0 0.0
    %1169 = vmatpush1.msra.mxu0 0.0
    %1170 = vmatprep.subr.mxu0 0.0
    %1171 = vmatpush1.msra.mxu0 0.0
    %1172 = vmatprep.subr.mxu0 0.0
    %1173 = vmatpush1.msra.mxu0 0.0
    %1174 = vmatprep.subr.mxu0 0.0
    %1175 = vmatpush1.msra.mxu0 0.0
    %1176 = vmatprep.subr.mxu0 0.0
    %1177 = vmatpush1.msra.mxu0 0.0
    %1178 = vmatprep.subr.mxu0 0.0
    %1179 = vmatpush1.msra.mxu0 0.0
    %1180 = vmatprep.subr.mxu0 0.0
    %1181 = vmatpush1.msra.mxu0 0.0
    %1182 = vmatprep.subr.mxu0 0.0
    %1183 = vmatpush1.msra.mxu0 0.0
    %1184 = vmatprep.subr.mxu0 0.0
    %1185 = vmatpush1.msra.mxu0 %v1149
    %1186 = vmatprep.subr.mxu0 0.0
    %1187 = vmatpush2.msra.mxu0 0.0
    %1188 = vmatprep.subr.mxu0 0.0
    %1189 = vmatpush2.msra.mxu0 0.0
    %1190 = vmatprep.subr.mxu0 0.0
    %1191 = vmatpush2.msra.mxu0 0.0
    %1192 = vmatprep.subr.mxu0 0.0
    %1193 = vmatpush2.msra.mxu0 0.0
    %1194 = vmatprep.subr.mxu0 0.0
    %1195 = vmatpush2.msra.mxu0 0.0
    %1196 = vmatprep.subr.mxu0 0.0
    %1197 = vmatpush2.msra.mxu0 0.0
    %1198 = vmatprep.subr.mxu0 0.0
    %1199 = vmatpush2.msra.mxu0 0.0
    %1200 = vmatprep.subr.mxu0 0.0
    %1201 = vmatpush2.msra.mxu0 0.0
    %1202 = vmatprep.subr.mxu0 0.0
    %1203 = vmatpush2.msra.mxu0 0.0
    %1204 = vmatprep.subr.mxu0 0.0
    %1205 = vmatpush2.msra.mxu0 0.0
    %1206 = vmatprep.subr.mxu0 0.0
    %1207 = vmatpush2.msra.mxu0 0.0
    %1208 = vmatprep.subr.mxu0 0.0
    %1209 = vmatpush2.msra.mxu0 0.0
    %1210 = vmatprep.subr.mxu0 0.0
    %1211 = vmatpush2.msra.mxu0 0.0
    %1212 = vmatprep.subr.mxu0 0.0
    %1213 = vmatpush2.msra.mxu0 0.0
    %1214 = vmatprep.subr.mxu0 0.0
    %1215 = vmatpush2.msra.mxu0 0.0
    %1216 = vmatprep.subr.mxu0 0.0
    %1217 = vmatpush2.msra.mxu0 0.0
    %1218 = vmatprep.mubr.f32.mxu0 0.0
    %1219 = vmatmul.mubr.f32.gmra.mxu0 %v1152
    %v1220 = vpop.f32.mrf.mxu0
    %v1221 = vadd.f32 0.0, %v1220
    %v1222 = vpop.f32.mrf.mxu0
    %1223 = vdwg.mxu0
    %1224 = vrot.lane.b32.xlu0 %v216, 64
    %v1225 = vpop.permute.xlu0 %1224
    %v1228 = vsel %vm225, %v916, 0
    %1230 = vmatprep.subr.mxu0 0.0
    %1231 = vmatpush1.msra.mxu0 0.0
    %1232 = vmatprep.subr.mxu0 0.0
    %1233 = vmatpush1.msra.mxu0 0.0
    %1234 = vmatprep.subr.mxu0 0.0
    %1235 = vmatpush1.msra.mxu0 0.0
    %1236 = vmatprep.subr.mxu0 0.0
    %1237 = vmatpush1.msra.mxu0 0.0
    %1238 = vmatprep.subr.mxu0 0.0
    %1239 = vmatpush1.msra.mxu0 0.0
    %1240 = vmatprep.subr.mxu0 0.0
    %1241 = vmatpush1.msra.mxu0 0.0
    %1242 = vmatprep.subr.mxu0 0.0
    %1243 = vmatpush1.msra.mxu0 0.0
    %1244 = vmatprep.subr.mxu0 0.0
    %1245 = vmatpush1.msra.mxu0 0.0
    %1246 = vmatprep.subr.mxu0 0.0
    %1247 = vmatpush1.msra.mxu0 0.0
    %1248 = vmatprep.subr.mxu0 0.0
    %1249 = vmatpush1.msra.mxu0 0.0
    %1250 = vmatprep.subr.mxu0 0.0
    %1251 = vmatpush1.msra.mxu0 0.0
    %1252 = vmatprep.subr.mxu0 0.0
    %1253 = vmatpush1.msra.mxu0 0.0
    %1254 = vmatprep.subr.mxu0 0.0
    %1255 = vmatpush1.msra.mxu0 0.0
    %1256 = vmatprep.subr.mxu0 0.0
    %1257 = vmatpush1.msra.mxu0 0.0
    %1258 = vmatprep.subr.mxu0 0.0
    %1259 = vmatpush1.msra.mxu0 0.0
    %1260 = vmatprep.subr.mxu0 0.0
    %1261 = vmatpush1.msra.mxu0 %v1225
    %1262 = vmatprep.subr.mxu0 0.0
    %1263 = vmatpush2.msra.mxu0 0.0
    %1264 = vmatprep.subr.mxu0 0.0
    %1265 = vmatpush2.msra.mxu0 0.0
    %1266 = vmatprep.subr.mxu0 0.0
    %1267 = vmatpush2.msra.mxu0 0.0
    %1268 = vmatprep.subr.mxu0 0.0
    %1269 = vmatpush2.msra.mxu0 0.0
    %1270 = vmatprep.subr.mxu0 0.0
    %1271 = vmatpush2.msra.mxu0 0.0
    %1272 = vmatprep.subr.mxu0 0.0
    %1273 = vmatpush2.msra.mxu0 0.0
    %1274 = vmatprep.subr.mxu0 0.0
    %1275 = vmatpush2.msra.mxu0 0.0
    %1276 = vmatprep.subr.mxu0 0.0
    %1277 = vmatpush2.msra.mxu0 0.0
    %1278 = vmatprep.subr.mxu0 0.0
    %1279 = vmatpush2.msra.mxu0 0.0
    %1280 = vmatprep.subr.mxu0 0.0
    %1281 = vmatpush2.msra.mxu0 0.0
    %1282 = vmatprep.subr.mxu0 0.0
    %1283 = vmatpush2.msra.mxu0 0.0
    %1284 = vmatprep.subr.mxu0 0.0
    %1285 = vmatpush2.msra.mxu0 0.0
    %1286 = vmatprep.subr.mxu0 0.0
    %1287 = vmatpush2.msra.mxu0 0.0
    %1288 = vmatprep.subr.mxu0 0.0
    %1289 = vmatpush2.msra.mxu0 0.0
    %1290 = vmatprep.subr.mxu0 0.0
    %1291 = vmatpush2.msra.mxu0 0.0
    %1292 = vmatprep.subr.mxu0 0.0
    %1293 = vmatpush2.msra.mxu0 0.0
    %1294 = vmatprep.mubr.f32.mxu0 0.0
    %1295 = vmatmul.mubr.f32.gmra.mxu0 %v1228
    %v1296 = vpop.f32.mrf.mxu0
    %v1297 = vadd.f32 0.0, %v1296
    %v1298 = vpop.f32.mrf.mxu0
    %1299 = vdwg.mxu0
    %1300 = vrot.lane.b32.xlu0 %v218, 64
    %v1301 = vpop.permute.xlu0 %1300
    %v1304 = vsel %vm225, %v917, 0
    %1306 = vmatprep.subr.mxu0 0.0
    %1307 = vmatpush1.msra.mxu0 0.0
    %1308 = vmatprep.subr.mxu0 0.0
    %1309 = vmatpush1.msra.mxu0 0.0
    %1310 = vmatprep.subr.mxu0 0.0
    %1311 = vmatpush1.msra.mxu0 0.0
    %1312 = vmatprep.subr.mxu0 0.0
    %1313 = vmatpush1.msra.mxu0 0.0
    %1314 = vmatprep.subr.mxu0 0.0
    %1315 = vmatpush1.msra.mxu0 0.0
    %1316 = vmatprep.subr.mxu0 0.0
    %1317 = vmatpush1.msra.mxu0 0.0
    %1318 = vmatprep.subr.mxu0 0.0
    %1319 = vmatpush1.msra.mxu0 0.0
    %1320 = vmatprep.subr.mxu0 0.0
    %1321 = vmatpush1.msra.mxu0 0.0
    %1322 = vmatprep.subr.mxu0 0.0
    %1323 = vmatpush1.msra.mxu0 0.0
    %1324 = vmatprep.subr.mxu0 0.0
    %1325 = vmatpush1.msra.mxu0 0.0
    %1326 = vmatprep.subr.mxu0 0.0
    %1327 = vmatpush1.msra.mxu0 0.0
    %1328 = vmatprep.subr.mxu0 0.0
    %1329 = vmatpush1.msra.mxu0 0.0
    %1330 = vmatprep.subr.mxu0 0.0
    %1331 = vmatpush1.msra.mxu0 0.0
    %1332 = vmatprep.subr.mxu0 0.0
    %1333 = vmatpush1.msra.mxu0 0.0
    %1334 = vmatprep.subr.mxu0 0.0
    %1335 = vmatpush1.msra.mxu0 0.0
    %1336 = vmatprep.subr.mxu0 0.0
    %1337 = vmatpush1.msra.mxu0 %v1301
    %1338 = vmatprep.subr.mxu0 0.0
    %1339 = vmatpush2.msra.mxu0 0.0
    %1340 = vmatprep.subr.mxu0 0.0
    %1341 = vmatpush2.msra.mxu0 0.0
    %1342 = vmatprep.subr.mxu0 0.0
    %1343 = vmatpush2.msra.mxu0 0.0
    %1344 = vmatprep.subr.mxu0 0.0
    %1345 = vmatpush2.msra.mxu0 0.0
    %1346 = vmatprep.subr.mxu0 0.0
    %1347 = vmatpush2.msra.mxu0 0.0
    %1348 = vmatprep.subr.mxu0 0.0
    %1349 = vmatpush2.msra.mxu0 0.0
    %1350 = vmatprep.subr.mxu0 0.0
    %1351 = vmatpush2.msra.mxu0 0.0
    %1352 = vmatprep.subr.mxu0 0.0
    %1353 = vmatpush2.msra.mxu0 0.0
    %1354 = vmatprep.subr.mxu0 0.0
    %1355 = vmatpush2.msra.mxu0 0.0
    %1356 = vmatprep.subr.mxu0 0.0
    %1357 = vmatpush2.msra.mxu0 0.0
    %1358 = vmatprep.subr.mxu0 0.0
    %1359 = vmatpush2.msra.mxu0 0.0
    %1360 = vmatprep.subr.mxu0 0.0
    %1361 = vmatpush2.msra.mxu0 0.0
    %1362 = vmatprep.subr.mxu0 0.0
    %1363 = vmatpush2.msra.mxu0 0.0
    %1364 = vmatprep.subr.mxu0 0.0
    %1365 = vmatpush2.msra.mxu0 0.0
    %1366 = vmatprep.subr.mxu0 0.0
    %1367 = vmatpush2.msra.mxu0 0.0
    %1368 = vmatprep.subr.mxu0 0.0
    %1369 = vmatpush2.msra.mxu0 0.0
    %1370 = vmatprep.mubr.f32.mxu0 0.0
    %1371 = vmatmul.mubr.f32.gmra.mxu0 %v1304
    %v1372 = vpop.f32.mrf.mxu0
    %v1373 = vadd.f32 0.0, %v1372
    %v1374 = vpop.f32.mrf.mxu0
    %1375 = vdwg.mxu0
    %1376 = vrot.lane.b32.xlu0 %v220, 64
    %v1377 = vpop.permute.xlu0 %1376
    %v1380 = vsel %vm225, %v918, 0
    %1382 = vmatprep.subr.mxu0 0.0
    %1383 = vmatpush1.msra.mxu0 0.0
    %1384 = vmatprep.subr.mxu0 0.0
    %1385 = vmatpush1.msra.mxu0 0.0
    %1386 = vmatprep.subr.mxu0 0.0
    %1387 = vmatpush1.msra.mxu0 0.0
    %1388 = vmatprep.subr.mxu0 0.0
    %1389 = vmatpush1.msra.mxu0 0.0
    %1390 = vmatprep.subr.mxu0 0.0
    %1391 = vmatpush1.msra.mxu0 0.0
    %1392 = vmatprep.subr.mxu0 0.0
    %1393 = vmatpush1.msra.mxu0 0.0
    %1394 = vmatprep.subr.mxu0 0.0
    %1395 = vmatpush1.msra.mxu0 0.0
    %1396 = vmatprep.subr.mxu0 0.0
    %1397 = vmatpush1.msra.mxu0 0.0
    %1398 = vmatprep.subr.mxu0 0.0
    %1399 = vmatpush1.msra.mxu0 0.0
    %1400 = vmatprep.subr.mxu0 0.0
    %1401 = vmatpush1.msra.mxu0 0.0
    %1402 = vmatprep.subr.mxu0 0.0
    %1403 = vmatpush1.msra.mxu0 0.0
    %1404 = vmatprep.subr.mxu0 0.0
    %1405 = vmatpush1.msra.mxu0 0.0
    %1406 = vmatprep.subr.mxu0 0.0
    %1407 = vmatpush1.msra.mxu0 0.0
    %1408 = vmatprep.subr.mxu0 0.0
    %1409 = vmatpush1.msra.mxu0 0.0
    %1410 = vmatprep.subr.mxu0 0.0
    %1411 = vmatpush1.msra.mxu0 0.0
    %1412 = vmatprep.subr.mxu0 0.0
    %1413 = vmatpush1.msra.mxu0 %v1377
    %1414 = vmatprep.subr.mxu0 0.0
    %1415 = vmatpush2.msra.mxu0 0.0
    %1416 = vmatprep.subr.mxu0 0.0
    %1417 = vmatpush2.msra.mxu0 0.0
    %1418 = vmatprep.subr.mxu0 0.0
    %1419 = vmatpush2.msra.mxu0 0.0
    %1420 = vmatprep.subr.mxu0 0.0
    %1421 = vmatpush2.msra.mxu0 0.0
    %1422 = vmatprep.subr.mxu0 0.0
    %1423 = vmatpush2.msra.mxu0 0.0
    %1424 = vmatprep.subr.mxu0 0.0
    %1425 = vmatpush2.msra.mxu0 0.0
    %1426 = vmatprep.subr.mxu0 0.0
    %1427 = vmatpush2.msra.mxu0 0.0
    %1428 = vmatprep.subr.mxu0 0.0
    %1429 = vmatpush2.msra.mxu0 0.0
    %1430 = vmatprep.subr.mxu0 0.0
    %1431 = vmatpush2.msra.mxu0 0.0
    %1432 = vmatprep.subr.mxu0 0.0
    %1433 = vmatpush2.msra.mxu0 0.0
    %1434 = vmatprep.subr.mxu0 0.0
    %1435 = vmatpush2.msra.mxu0 0.0
    %1436 = vmatprep.subr.mxu0 0.0
    %1437 = vmatpush2.msra.mxu0 0.0
    %1438 = vmatprep.subr.mxu0 0.0
    %1439 = vmatpush2.msra.mxu0 0.0
    %1440 = vmatprep.subr.mxu0 0.0
    %1441 = vmatpush2.msra.mxu0 0.0
    %1442 = vmatprep.subr.mxu0 0.0
    %1443 = vmatpush2.msra.mxu0 0.0
    %1444 = vmatprep.subr.mxu0 0.0
    %1445 = vmatpush2.msra.mxu0 0.0
    %1446 = vmatprep.mubr.f32.mxu0 0.0
    %1447 = vmatmul.mubr.f32.gmra.mxu0 %v1380
    %v1448 = vpop.f32.mrf.mxu0
    %v1449 = vadd.f32 0.0, %v1448
    %v1450 = vpop.f32.mrf.mxu0
    %1451 = vdwg.mxu0
    %1452 = vrot.lane.b32.xlu0 %v222, 64
    %v1453 = vpop.permute.xlu0 %1452
    %v1456 = vsel %vm225, %v919, 0
    %1458 = vmatprep.subr.mxu0 0.0
    %1459 = vmatpush1.msra.mxu0 0.0
    %1460 = vmatprep.subr.mxu0 0.0
    %1461 = vmatpush1.msra.mxu0 0.0
    %1462 = vmatprep.subr.mxu0 0.0
    %1463 = vmatpush1.msra.mxu0 0.0
    %1464 = vmatprep.subr.mxu0 0.0
    %1465 = vmatpush1.msra.mxu0 0.0
    %1466 = vmatprep.subr.mxu0 0.0
    %1467 = vmatpush1.msra.mxu0 0.0
    %1468 = vmatprep.subr.mxu0 0.0
    %1469 = vmatpush1.msra.mxu0 0.0
    %1470 = vmatprep.subr.mxu0 0.0
    %1471 = vmatpush1.msra.mxu0 0.0
    %1472 = vmatprep.subr.mxu0 0.0
    %1473 = vmatpush1.msra.mxu0 0.0
    %1474 = vmatprep.subr.mxu0 0.0
    %1475 = vmatpush1.msra.mxu0 0.0
    %1476 = vmatprep.subr.mxu0 0.0
    %1477 = vmatpush1.msra.mxu0 0.0
    %1478 = vmatprep.subr.mxu0 0.0
    %1479 = vmatpush1.msra.mxu0 0.0
    %1480 = vmatprep.subr.mxu0 0.0
    %1481 = vmatpush1.msra.mxu0 0.0
    %1482 = vmatprep.subr.mxu0 0.0
    %1483 = vmatpush1.msra.mxu0 0.0
    %1484 = vmatprep.subr.mxu0 0.0
    %1485 = vmatpush1.msra.mxu0 0.0
    %1486 = vmatprep.subr.mxu0 0.0
    %1487 = vmatpush1.msra.mxu0 0.0
    %1488 = vmatprep.subr.mxu0 0.0
    %1489 = vmatpush1.msra.mxu0 %v1453
    %1490 = vmatprep.subr.mxu0 0.0
    %1491 = vmatpush2.msra.mxu0 0.0
    %1492 = vmatprep.subr.mxu0 0.0
    %1493 = vmatpush2.msra.mxu0 0.0
    %1494 = vmatprep.subr.mxu0 0.0
    %1495 = vmatpush2.msra.mxu0 0.0
    %1496 = vmatprep.subr.mxu0 0.0
    %1497 = vmatpush2.msra.mxu0 0.0
    %1498 = vmatprep.subr.mxu0 0.0
    %1499 = vmatpush2.msra.mxu0 0.0
    %1500 = vmatprep.subr.mxu0 0.0
    %1501 = vmatpush2.msra.mxu0 0.0
    %1502 = vmatprep.subr.mxu0 0.0
    %1503 = vmatpush2.msra.mxu0 0.0
    %1504 = vmatprep.subr.mxu0 0.0
    %1505 = vmatpush2.msra.mxu0 0.0
    %1506 = vmatprep.subr.mxu0 0.0
    %1507 = vmatpush2.msra.mxu0 0.0
    %1508 = vmatprep.subr.mxu0 0.0
    %1509 = vmatpush2.msra.mxu0 0.0
    %1510 = vmatprep.subr.mxu0 0.0
    %1511 = vmatpush2.msra.mxu0 0.0
    %1512 = vmatprep.subr.mxu0 0.0
    %1513 = vmatpush2.msra.mxu0 0.0
    %1514 = vmatprep.subr.mxu0 0.0
    %1515 = vmatpush2.msra.mxu0 0.0
    %1516 = vmatprep.subr.mxu0 0.0
    %1517 = vmatpush2.msra.mxu0 0.0
    %1518 = vmatprep.subr.mxu0 0.0
    %1519 = vmatpush2.msra.mxu0 0.0
    %1520 = vmatprep.subr.mxu0 0.0
    %1521 = vmatpush2.msra.mxu0 0.0
    %1522 = vmatprep.mubr.f32.mxu0 0.0
    %1523 = vmatmul.mubr.f32.gmra.mxu0 %v1456
    %v1524 = vpop.f32.mrf.mxu0
    %v1525 = vadd.f32 0.0, %v1524
    %v1526 = vpop.f32.mrf.mxu0
    %1527 = vdwg.mxu0
    %1530 = vrot.lane.b32.xlu0 %v1145, 8
    %v1531 = vpop.permute.xlu0 %1530
    %1532 = vrot.lane.b32.xlu0 %v1221, 8
    %v1533 = vpop.permute.xlu0 %1532
    %1538 = vrot.lane.b32.xlu0 %v1297, 16
    %v1539 = vpop.permute.xlu0 %1538
    %1540 = vrot.lane.b32.xlu0 %v1373, 16
    %v1541 = vpop.permute.xlu0 %1540
    %1546 = vrot.lane.b32.xlu0 %v1449, 24
    %v1547 = vpop.permute.xlu0 %1546
    %1548 = vrot.lane.b32.xlu0 %v1525, 24
    %v1549 = vpop.permute.xlu0 %1548
    %v1552 = vsel %vm225, %v993, %v1531
    %v1553 = vsel %vm225, %v1069, %v1533
    %vm1554 = vcmask 130048
    %v1555 = vsel %vm1554, %v1552, %v1539
    %v1556 = vsel %vm1554, %v1553, %v1541
    %vm1557 = vcmask 195584
    %v1558 = vsel %vm1557, %v1555, %v1547
    %v1559 = vsel %vm1557, %v1556, %v1549
    %v1560 = vld [vmem:[%s6] sm:$0x1]
    %v1562 = vlaneseq
    %v1563 = vshrl.u32 %v1562, 7
    %v1564 = vsub.s32 0, %v1563
    %v1565 = vrot.slane %v1560, %v1564
    %v1568 = vsel %vm77, %v1558, 0
    %v1571 = vsel %vm77, %v1559, 0
    %1573 = vmatprep.subr.mxu0 0.0
    %1574 = vmatpush1.msra.mxu0 0.0
    %1575 = vmatprep.subr.mxu0 0.0
    %1576 = vmatpush1.msra.mxu0 0.0
    %1577 = vmatprep.subr.mxu0 0.0
    %1578 = vmatpush1.msra.mxu0 0.0
    %1579 = vmatprep.subr.mxu0 0.0
    %1580 = vmatpush1.msra.mxu0 0.0
    %1581 = vmatprep.subr.mxu0 0.0
    %1582 = vmatpush1.msra.mxu0 0.0
    %1583 = vmatprep.subr.mxu0 0.0
    %1584 = vmatpush1.msra.mxu0 0.0
    %1585 = vmatprep.subr.mxu0 0.0
    %1586 = vmatpush1.msra.mxu0 0.0
    %1587 = vmatprep.subr.mxu0 0.0
    %1588 = vmatpush1.msra.mxu0 0.0
    %1589 = vmatprep.subr.mxu0 0.0
    %1590 = vmatpush1.msra.mxu0 0.0
    %1591 = vmatprep.subr.mxu0 0.0
    %1592 = vmatpush1.msra.mxu0 0.0
    %1593 = vmatprep.subr.mxu0 0.0
    %1594 = vmatpush1.msra.mxu0 0.0
    %1595 = vmatprep.subr.mxu0 0.0
    %1596 = vmatpush1.msra.mxu0 0.0
    %1597 = vmatprep.subr.mxu0 0.0
    %1598 = vmatpush1.msra.mxu0 %v52
    %1599 = vmatprep.subr.mxu0 0.0
    %1600 = vmatpush1.msra.mxu0 %v51
    %1601 = vmatprep.subr.mxu0 0.0
    %1602 = vmatpush1.msra.mxu0 %v50
    %1603 = vmatprep.subr.mxu0 0.0
    %1604 = vmatpush1.msra.mxu0 %v49
    %1605 = vmatprep.subr.mxu0 0.0
    %1606 = vmatpush2.msra.mxu0 0.0
    %1607 = vmatprep.subr.mxu0 0.0
    %1608 = vmatpush2.msra.mxu0 0.0
    %1609 = vmatprep.subr.mxu0 0.0
    %1610 = vmatpush2.msra.mxu0 0.0
    %1611 = vmatprep.subr.mxu0 0.0
    %1612 = vmatpush2.msra.mxu0 0.0
    %1613 = vmatprep.subr.mxu0 0.0
    %1614 = vmatpush2.msra.mxu0 0.0
    %1615 = vmatprep.subr.mxu0 0.0
    %1616 = vmatpush2.msra.mxu0 0.0
    %1617 = vmatprep.subr.mxu0 0.0
    %1618 = vmatpush2.msra.mxu0 0.0
    %1619 = vmatprep.subr.mxu0 0.0
    %1620 = vmatpush2.msra.mxu0 0.0
    %1621 = vmatprep.subr.mxu0 0.0
    %1622 = vmatpush2.msra.mxu0 0.0
    %1623 = vmatprep.subr.mxu0 0.0
    %1624 = vmatpush2.msra.mxu0 0.0
    %1625 = vmatprep.subr.mxu0 0.0
    %1626 = vmatpush2.msra.mxu0 0.0
    %1627 = vmatprep.subr.mxu0 0.0
    %1628 = vmatpush2.msra.mxu0 0.0
    %1629 = vmatprep.subr.mxu0 0.0
    %1630 = vmatpush2.msra.mxu0 0.0
    %1631 = vmatprep.subr.mxu0 0.0
    %1632 = vmatpush2.msra.mxu0 0.0
    %1633 = vmatprep.subr.mxu0 0.0
    %1634 = vmatpush2.msra.mxu0 0.0
    %1635 = vmatprep.subr.mxu0 0.0
    %1636 = vmatpush2.msra.mxu0 0.0
    %1637 = vmatprep.mubr.f32.mxu0 0.0
    %1638 = vmatmul.mubr.f32.gmra.mxu0 %v1568
    %v1639 = vpop.f32.mrf.mxu0
    %v1640 = vadd.f32 %v1565, %v1639
    %v1641 = vpop.f32.mrf.mxu0
    %1642 = vmatprep.mubr.f32.mxu0 0.0
    %1643 = vmatmul.mubr.f32.gmra.mxu0 %v1571
    %v1644 = vpop.f32.mrf.mxu0
    %v1645 = vadd.f32 %v1565, %v1644
    %v1646 = vpop.f32.mrf.mxu0
    %1647 = vdwg.mxu0
    %v1648 = vadd.f32 %v73, %v1640
    %v1649 = vadd.f32 %v74, %v1645
    %v1650 = vld [vmem:[%s7] sm:$0x1]
    %v1651 = vld [vmem:[%s8] sm:$0x1]
    %v1652 = vsel %vm77, %v1648, 0.0
    %1653 = vadd.xlane.f32.xlu0 %v1652
    %v1654 = vpop.xlane.xlu0 %1653
    %v1655 = vsel %vm77, %v1649, 0.0
    %1656 = vadd.xlane.f32.xlu0 %v1655
    %v1657 = vpop.xlane.xlu0 %1656
    %v1658 = vmul.f32 %v1654, %v84
    %v1659 = vmul.f32 %v1657, %v84
    %v1660 = vsub.f32 %v1648, %v1658
    %v1661 = vsub.f32 %v1649, %v1659
    %v1662 = vmul.f32 %v1660, %v1660
    %v1663 = vmul.f32 %v1661, %v1661
    %v1664 = vsel %vm77, %v1662, 0.0
    %1665 = vadd.xlane.f32.xlu0 %v1664
    %v1666 = vpop.xlane.xlu0 %1665
    %v1667 = vsel %vm77, %v1663, 0.0
    %1668 = vadd.xlane.f32.xlu0 %v1667
    %v1669 = vpop.xlane.xlu0 %1668
    %v1670 = vmul.f32 %v1666, %v84
    %v1671 = vmul.f32 %v1669, %v84
    %v1672 = vadd.f32 %v1670, 1e-05
    %v1673 = vadd.f32 %v1671, 1e-05
    %v1674 = vrsqrt.pop %v1672
    %v1675 = vrsqrt.pop %v1673
    %v1676 = vmul.f32 %v1660, %v1674
    %v1677 = vmul.f32 %v1661, %v1675
    %v1679 = vlaneseq
    %v1680 = vshrl.u32 %v1679, 7
    %v1681 = vsub.s32 0, %v1680
    %v1682 = vrot.slane %v1650, %v1681
    %v1684 = vmul.f32 %v1676, %v1682
    %v1685 = vmul.f32 %v1677, %v1682
    %v1687 = vlaneseq
    %v1688 = vshrl.u32 %v1687, 7
    %v1689 = vsub.s32 0, %v1688
    %v1690 = vrot.slane %v1651, %v1689
    %v1692 = vadd.f32 %v1684, %v1690
    %v1693 = vadd.f32 %v1685, %v1690
    %v1694 = vld [vmem:[%s10] sm:$0x1]
    %v1696 = vlaneseq
    %v1697 = vshrl.u32 %v1696, 7
    %v1698 = vsub.s32 0, %v1697
    %v1699 = vrot.slane %v1694, %v1698
    %v1702 = vsel %vm77, %v1692, 0
    %v1705 = vsel %vm77, %v1693, 0
    %1707 = vmatprep.subr.mxu0 0.0
    %1708 = vmatpush1.msra.mxu0 0.0
    %1709 = vmatprep.subr.mxu0 0.0
    %1710 = vmatpush1.msra.mxu0 0.0
    %1711 = vmatprep.subr.mxu0 0.0
    %1712 = vmatpush1.msra.mxu0 0.0
    %1713 = vmatprep.subr.mxu0 0.0
    %1714 = vmatpush1.msra.mxu0 0.0
    %1715 = vmatprep.subr.mxu0 0.0
    %1716 = vmatpush1.msra.mxu0 0.0
    %1717 = vmatprep.subr.mxu0 0.0
    %1718 = vmatpush1.msra.mxu0 0.0
    %1719 = vmatprep.subr.mxu0 0.0
    %1720 = vmatpush1.msra.mxu0 0.0
    %1721 = vmatprep.subr.mxu0 0.0
    %1722 = vmatpush1.msra.mxu0 0.0
    %1723 = vmatprep.subr.mxu0 0.0
    %1724 = vmatpush1.msra.mxu0 0.0
    %1725 = vmatprep.subr.mxu0 0.0
    %1726 = vmatpush1.msra.mxu0 0.0
    %1727 = vmatprep.subr.mxu0 0.0
    %1728 = vmatpush1.msra.mxu0 0.0
    %1729 = vmatprep.subr.mxu0 0.0
    %1730 = vmatpush1.msra.mxu0 0.0
    %1731 = vmatprep.subr.mxu0 0.0
    %1732 = vmatpush1.msra.mxu0 %v56
    %1733 = vmatprep.subr.mxu0 0.0
    %1734 = vmatpush1.msra.mxu0 %v55
    %1735 = vmatprep.subr.mxu0 0.0
    %1736 = vmatpush1.msra.mxu0 %v54
    %1737 = vmatprep.subr.mxu0 0.0
    %1738 = vmatpush1.msra.mxu0 %v53
    %1739 = vmatprep.subr.mxu0 0.0
    %1740 = vmatpush2.msra.mxu0 0.0
    %1741 = vmatprep.subr.mxu0 0.0
    %1742 = vmatpush2.msra.mxu0 0.0
    %1743 = vmatprep.subr.mxu0 0.0
    %1744 = vmatpush2.msra.mxu0 0.0
    %1745 = vmatprep.subr.mxu0 0.0
    %1746 = vmatpush2.msra.mxu0 0.0
    %1747 = vmatprep.subr.mxu0 0.0
    %1748 = vmatpush2.msra.mxu0 0.0
    %1749 = vmatprep.subr.mxu0 0.0
    %1750 = vmatpush2.msra.mxu0 0.0
    %1751 = vmatprep.subr.mxu0 0.0
    %1752 = vmatpush2.msra.mxu0 0.0
    %1753 = vmatprep.subr.mxu0 0.0
    %1754 = vmatpush2.msra.mxu0 0.0
    %1755 = vmatprep.subr.mxu0 0.0
    %1756 = vmatpush2.msra.mxu0 0.0
    %1757 = vmatprep.subr.mxu0 0.0
    %1758 = vmatpush2.msra.mxu0 0.0
    %1759 = vmatprep.subr.mxu0 0.0
    %1760 = vmatpush2.msra.mxu0 0.0
    %1761 = vmatprep.subr.mxu0 0.0
    %1762 = vmatpush2.msra.mxu0 0.0
    %1763 = vmatprep.subr.mxu0 0.0
    %1764 = vmatpush2.msra.mxu0 0.0
    %1765 = vmatprep.subr.mxu0 0.0
    %1766 = vmatpush2.msra.mxu0 0.0
    %1767 = vmatprep.subr.mxu0 0.0
    %1768 = vmatpush2.msra.mxu0 0.0
    %1769 = vmatprep.subr.mxu0 0.0
    %1770 = vmatpush2.msra.mxu0 0.0
    %1771 = vmatprep.mubr.f32.mxu0 0.0
    %1772 = vmatmul.mubr.f32.gmra.mxu0 %v1702
    %v1773 = vpop.f32.mrf.mxu0
    %v1774 = vadd.f32 %v1699, %v1773
    %v1775 = vpop.f32.mrf.mxu0
    %1776 = vmatprep.mubr.f32.mxu0 0.0
    %1777 = vmatmul.mubr.f32.gmra.mxu0 %v1705
    %v1778 = vpop.f32.mrf.mxu0
    %v1779 = vadd.f32 %v1699, %v1778
    %v1780 = vpop.f32.mrf.mxu0
    %1781 = vdwg.mxu0
    %v1782 = vmul.f32 %v1774, 1.702
    %v1783 = vmul.f32 %v1779, 1.702
    %v1784 = vxor.u32 %v1782, 2147483648
    %v1785 = vxor.u32 %v1783, 2147483648
    %v1786 = vmul.f32 %v1784, 1.442695
    %v1787 = vpow.pop %v1786
    %v1788 = vmul.f32 %v1785, 1.442695
    %v1789 = vpow.pop %v1788
    %v1790 = vadd.f32 %v1787, 1.0
    %v1791 = vadd.f32 %v1789, 1.0
    %v1792 = vrcp.pop %v1790
    %v1793 = vmul.f32 1.0, %v1792
    %v1794 = vrcp.pop %v1791
    %v1795 = vmul.f32 1.0, %v1794
    %v1796 = vmul.f32 %v1774, %v1793
    %v1797 = vmul.f32 %v1779, %v1795
    %v1798 = vld [vmem:[%s12] sm:$0x1]
    %v1800 = vlaneseq
    %v1801 = vshrl.u32 %v1800, 7
    %v1802 = vsub.s32 0, %v1801
    %v1803 = vrot.slane %v1798, %v1802
    %1805 = vmatprep.subr.mxu0 0.0
    %1806 = vmatpush1.msra.mxu0 %v72
    %1807 = vmatprep.subr.mxu0 0.0
    %1808 = vmatpush1.msra.mxu0 %v71
    %1809 = vmatprep.subr.mxu0 0.0
    %1810 = vmatpush1.msra.mxu0 %v70
    %1811 = vmatprep.subr.mxu0 0.0
    %1812 = vmatpush1.msra.mxu0 %v69
    %1813 = vmatprep.subr.mxu0 0.0
    %1814 = vmatpush1.msra.mxu0 %v68
    %1815 = vmatprep.subr.mxu0 0.0
    %1816 = vmatpush1.msra.mxu0 %v67
    %1817 = vmatprep.subr.mxu0 0.0
    %1818 = vmatpush1.msra.mxu0 %v66
    %1819 = vmatprep.subr.mxu0 0.0
    %1820 = vmatpush1.msra.mxu0 %v65
    %1821 = vmatprep.subr.mxu0 0.0
    %1822 = vmatpush1.msra.mxu0 %v64
    %1823 = vmatprep.subr.mxu0 0.0
    %1824 = vmatpush1.msra.mxu0 %v63
    %1825 = vmatprep.subr.mxu0 0.0
    %1826 = vmatpush1.msra.mxu0 %v62
    %1827 = vmatprep.subr.mxu0 0.0
    %1828 = vmatpush1.msra.mxu0 %v61
    %1829 = vmatprep.subr.mxu0 0.0
    %1830 = vmatpush1.msra.mxu0 %v60
    %1831 = vmatprep.subr.mxu0 0.0
    %1832 = vmatpush1.msra.mxu0 %v59
    %1833 = vmatprep.subr.mxu0 0.0
    %1834 = vmatpush1.msra.mxu0 %v58
    %1835 = vmatprep.subr.mxu0 0.0
    %1836 = vmatpush1.msra.mxu0 %v57
    %1837 = vmatprep.subr.mxu0 0.0
    %1838 = vmatpush2.msra.mxu0 0.0
    %1839 = vmatprep.subr.mxu0 0.0
    %1840 = vmatpush2.msra.mxu0 0.0
    %1841 = vmatprep.subr.mxu0 0.0
    %1842 = vmatpush2.msra.mxu0 0.0
    %1843 = vmatprep.subr.mxu0 0.0
    %1844 = vmatpush2.msra.mxu0 0.0
    %1845 = vmatprep.subr.mxu0 0.0
    %1846 = vmatpush2.msra.mxu0 0.0
    %1847 = vmatprep.subr.mxu0 0.0
    %1848 = vmatpush2.msra.mxu0 0.0
    %1849 = vmatprep.subr.mxu0 0.0
    %1850 = vmatpush2.msra.mxu0 0.0
    %1851 = vmatprep.subr.mxu0 0.0
    %1852 = vmatpush2.msra.mxu0 0.0
    %1853 = vmatprep.subr.mxu0 0.0
    %1854 = vmatpush2.msra.mxu0 0.0
    %1855 = vmatprep.subr.mxu0 0.0
    %1856 = vmatpush2.msra.mxu0 0.0
    %1857 = vmatprep.subr.mxu0 0.0
    %1858 = vmatpush2.msra.mxu0 0.0
    %1859 = vmatprep.subr.mxu0 0.0
    %1860 = vmatpush2.msra.mxu0 0.0
    %1861 = vmatprep.subr.mxu0 0.0
    %1862 = vmatpush2.msra.mxu0 0.0
    %1863 = vmatprep.subr.mxu0 0.0
    %1864 = vmatpush2.msra.mxu0 0.0
    %1865 = vmatprep.subr.mxu0 0.0
    %1866 = vmatpush2.msra.mxu0 0.0
    %1867 = vmatprep.subr.mxu0 0.0
    %1868 = vmatpush2.msra.mxu0 0.0
    %1869 = vmatprep.mubr.f32.mxu0 0.0
    %1870 = vmatmul.mubr.f32.gmra.mxu0 %v1796
    %v1871 = vpop.f32.mrf.mxu0
    %v1872 = vadd.f32 %v1803, %v1871
    %v1873 = vpop.f32.mrf.mxu0
    %1874 = vmatprep.mubr.f32.mxu0 0.0
    %1875 = vmatmul.mubr.f32.gmra.mxu0 %v1797
    %v1876 = vpop.f32.mrf.mxu0
    %v1877 = vadd.f32 %v1803, %v1876
    %v1878 = vpop.f32.mrf.mxu0
    %1879 = vdwg.mxu0
    %v1880 = vadd.f32 %v1648, %v1872
    %v1881 = vadd.f32 %v1649, %v1877
    %1882 = vst.msk [vmem:[#allocation2] sm:$0xff] %vm77, %v1880
    %1883 = vst.msk [vmem:[#allocation2 + $0x8] sm:$0xff] %vm77, %v1881
    // Predicated region
    $region54: #{tpu_custom_call.1} parent=1 // pred_check
      _
    $region55: #{tpu_custom_call.1} parent=1 // pred_check_branch
      %1885 = sbr.rel (0) target = $region57
    $region56: #{tpu_custom_call.1} parent=1 // pred_region
      %s1887 = ssub.s32 256, 256
      %1888 = vsyncadd [#allocation3], %s1887
      %s1889 = sshll.u32 [#allocation2], 4
      %s1890 = int_to_ptr.vmem [resolvable:$true] %s1889
      %1895 = dma.vmem_to_hbm [thread:$0]  %s1890, 256, %s13, [#allocation3], 128, 128, 8
    $region57: #{tpu_custom_call.1} parent=1 // pred_fallthru
      _
    // Predicated region
    $region58: #{tpu_custom_call.1} parent=1 // pred_check
      _
    $region59: #{tpu_custom_call.1} parent=1 // pred_check_branch
      %1897 = sbr.rel (0) target = $region61
    $region60: #{tpu_custom_call.1} parent=1 // pred_region
      %1898 = dma.done [#allocation3], 256
    $region61: #{tpu_custom_call.1} parent=1 // pred_fallthru
      _
    %1899 = vsyncpa [#allocation3], 1

</llo_original>
